<compile_context>
chip_gen: v7x
topology: tpu7x:2x2x1
jax: 0.10.0
libtpu: 0.0.40
codegen_flags: <defaults>
</compile_context>

<pallas_src>
import jax
import jax.numpy as jnp
from jax.experimental import pallas as pl
from jax.experimental.pallas import tpu as pltpu

_EPS = 1e-5
_LANES = 128
_MXU_DTYPE = jnp.bfloat16                      # MXU operand dtype (f32 accumulation)
_TAPS = [(kh, kw) for kh in range(3) for kw in range(3)]


def _round_up(x, m):
    return (x + m - 1) // m * m


# ---------------------------------------------------------------------------
# wrapper-side layout helpers (pure indexing glue, no FLOPs)
# ---------------------------------------------------------------------------

def _tap_map(stride):
    """tap t=(kh,kw) -> (phase_index, row_off, col_off); plus the slice read by the
    1x1 stride-s shortcut.  Phases are stride-phase decompositions of the padded
    input so in-kernel tap extraction needs only unstrided slicing."""
    if stride == 1:
        return [(0, kh, kw) for kh, kw in _TAPS], (0, 1, 1)
    # stride 2: padded row index 2h+kh -> (parity, offset)
    dec = {0: (0, 0), 1: (1, 0), 2: (0, 1)}
    taps = []
    for kh, kw in _TAPS:
        (pa, oh), (pb, ow) = dec[kh], dec[kw]
        taps.append((pa * 2 + pb, oh, ow))
    return taps, (1 * 2 + 1, 0, 0)             # shortcut reads x[2h,2w] = phase(1,1)


def _build_phases(x_nhwc, stride, cin_p):
    """Zero-pad (padding=1), pad channels to cin_p, split into stride phases, bf16.
    Total bytes ~= 1x the input (no replication)."""
    n, h, w, cin = x_nhwc.shape
    xp = jnp.pad(x_nhwc, ((0, 0), (1, 1), (1, 1), (0, cin_p - cin)))
    if stride == 1:
        return [xp.astype(_MXU_DTYPE)]
    return [xp[:, a::2, b::2, :].astype(_MXU_DTYPE)
            for a in range(2) for b in range(2)]


def _fused_conv3x3_weight(w, cin_p, cout_p):
    """OIHW (Cout,Cin,3,3) -> (9*cin_p, cout_p) bf16, tap-major row blocks."""
    cout, cin = w.shape[:2]
    wt = jnp.transpose(w, (2, 3, 1, 0))                        # (3,3,Cin,Cout)
    wt = jnp.pad(wt, ((0, 0), (0, 0), (0, cin_p - cin), (0, cout_p - cout)))
    return wt.reshape(9 * cin_p, cout_p).astype(_MXU_DTYPE)


def _proj_weight(w, cin_p, cout_p):
    """1x1 conv OIHW (Cout,Cin,1,1) -> (cin_p, cout_p) bf16."""
    cout, cin = w.shape[:2]
    wt = jnp.transpose(w.reshape(cout, cin), (1, 0))
    return jnp.pad(wt, ((0, cin_p - cin), (0, cout_p - cout))).astype(_MXU_DTYPE)


def _bn_affine(stats, gamma, beta, m_total, cout, cout_p):
    """Finalize training-mode BN (biased var, eps=1e-5) from per-tile (sum, sum_sq)
    partials into per-channel (scale, shift) so kernels apply BN as one FMA."""
    s = jnp.sum(stats[:, 0, :], axis=0)
    ss = jnp.sum(stats[:, 1, :], axis=0)
    mean = s / m_total
    var = jnp.maximum(ss / m_total - mean * mean, 0.0)
    g = jnp.pad(gamma.astype(jnp.float32), (0, cout_p - cout), constant_values=1.0)
    b = jnp.pad(beta.astype(jnp.float32), (0, cout_p - cout))
    scale = g * jax.lax.rsqrt(var + _EPS)
    shift = b - mean * scale
    return scale.reshape(1, cout_p), shift.reshape(1, cout_p)


# ---------------------------------------------------------------------------
# kernels
# ---------------------------------------------------------------------------

def _make_conv1_kernel(nb, Ho, Wo, cin_p, cout_p, taps, sc_tap, has_proj, n_phase):
    mb = nb * Ho * Wo

    def kernel(*refs):
        phase_refs = refs[:n_phase]
        w1_ref = refs[n_phase]
        if has_proj:
            wsc_ref = refs[n_phase + 1]
            y1_ref, st1_ref, ysc_ref, stsc_ref, slab_ref = refs[n_phase + 2:]
        else:
            y1_ref, st1_ref, slab_ref = refs[n_phase + 1:]

        # In-kernel im2col: 128-lane-aligned column blocks of a (mb, 9*cin_p) slab,
        # built from the once-DMA'd phase tiles (no 9x HBM replication).
        for t, (p, oh, ow) in enumerate(taps):
            tap = phase_refs[p][:, oh:oh + Ho, ow:ow + Wo, :]
            slab_ref[:, t * cin_p:(t + 1) * cin_p] = tap.reshape(mb, cin_p)

        # Single fused MXU matmul: K = 9*cin_p, bf16 operands, f32 accumulation.
        y1 = jnp.dot(slab_ref[...], w1_ref[...], preferred_element_type=jnp.float32)
        y1_ref[...] = y1
        # Single-pass BN statistics for this tile (finalized in the wrapper).
        st1_ref[0:1, 0:1, :] = jnp.sum(y1, axis=0, keepdims=True).reshape(1, 1, cout_p)
        st1_ref[0:1, 1:2, :] = jnp.sum(y1 * y1, axis=0, keepdims=True).reshape(1, 1, cout_p)

        if has_proj:
            p, oh, ow = sc_tap
            xs = phase_refs[p][:, oh:oh + Ho, ow:ow + Wo, :].reshape(mb, cin_p)
            ysc = jnp.dot(xs, wsc_ref[...], preferred_element_type=jnp.float32)
            ysc_ref[...] = ysc
            stsc_ref[0:1, 0:1, :] = jnp.sum(ysc, axis=0, keepdims=True).reshape(1, 1, cout_p)
            stsc_ref[0:1, 1:2, :] = jnp.sum(ysc * ysc, axis=0, keepdims=True).reshape(1, 1, cout_p)

    return kernel


def _make_conv2_kernel(nb, Ho, Wo, cout_p):
    mb = nb * Ho * Wo

    def kernel(y1_ref, scale1_ref, shift1_ref, w2_ref, y2_ref, st2_ref,
               h1p_ref, slab_ref):
        # BN1 (precomputed per-channel affine) + ReLU in f32, stored as bf16.
        h1 = jnp.maximum(y1_ref[...] * scale1_ref[...] + shift1_ref[...], 0.0)

        # Zero ONLY the 1-pixel halo frame; the interior is fully overwritten below.
        h1p_ref[:, 0:1, :, :] = jnp.zeros((nb, 1, Wo + 2, cout_p), _MXU_DTYPE)
        h1p_ref[:, Ho + 1:Ho + 2, :, :] = jnp.zeros((nb, 1, Wo + 2, cout_p), _MXU_DTYPE)
        h1p_ref[:, :, 0:1, :] = jnp.zeros((nb, Ho + 2, 1, cout_p), _MXU_DTYPE)
        h1p_ref[:, :, Wo + 1:Wo + 2, :] = jnp.zeros((nb, Ho + 2, 1, cout_p), _MXU_DTYPE)
        h1p_ref[:, 1:Ho + 1, 1:Wo + 1, :] = (
            h1.astype(_MXU_DTYPE).reshape(nb, Ho, Wo, cout_p))

        # In-kernel im2col for conv2 (stride 1, padding 1), lane-aligned blocks.
        for t, (kh, kw) in enumerate(_TAPS):
            slab_ref[:, t * cout_p:(t + 1) * cout_p] = (
                h1p_ref[:, kh:kh + Ho, kw:kw + Wo, :].reshape(mb, cout_p))

        y2 = jnp.dot(slab_ref[...], w2_ref[...], preferred_element_type=jnp.float32)
        y2_ref[...] = y2
        st2_ref[0:1, 0:1, :] = jnp.sum(y2, axis=0, keepdims=True).reshape(1, 1, cout_p)
        st2_ref[0:1, 1:2, :] = jnp.sum(y2 * y2, axis=0, keepdims=True).reshape(1, 1, cout_p)

    return kernel


def _make_combine_kernel(has_proj):
    if has_proj:
        def kernel(y2_ref, sc_ref, s2_ref, b2_ref, ssc_ref, bsc_ref, out_ref):
            left = y2_ref[...] * s2_ref[...] + b2_ref[...]
            right = sc_ref[...] * ssc_ref[...] + bsc_ref[...]
            out_ref[...] = jnp.maximum(left + right, 0.0)
    else:
        def kernel(y2_ref, sc_ref, s2_ref, b2_ref, out_ref):
            left = y2_ref[...] * s2_ref[...] + b2_ref[...]
            out_ref[...] = jnp.maximum(left + sc_ref[...], 0.0)
    return kernel


# ---------------------------------------------------------------------------
# forward pass
# ---------------------------------------------------------------------------

def residual_block(x_nchw, params, stride, rows_per_tile=512):
    """Forward pass of ResidualBlock. x_nchw: (N, Cin, H, W) float32 (PyTorch layout)."""
    N, Cin, H, W = x_nchw.shape
    Cout = params["w1"].shape[0]
    assert stride in (1, 2) and H % stride == 0 and W % stride == 0
    Ho, Wo = H // stride, W // stride
    m_img = Ho * Wo
    M = N * m_img
    has_proj = (stride != 1) or (Cin != Cout)

    cin_p = _round_up(Cin, _LANES)
    cout_p = _round_up(Cout, _LANES)

    # Batch tile: whole images per grid step (no spatial halo across tiles).
    # ~512 rows/step targets the measured HBM-roofline sweet spot on v5e/v6e while
    # keeping the per-step VMEM footprint far under v7x's 64 MiB budget.
    nb = max(1, min(N, rows_per_tile // m_img))
    while N % nb:
        nb -= 1
    T = N // nb
    mb = nb * m_img

    x_nhwc = jnp.transpose(x_nchw, (0, 2, 3, 1)).astype(jnp.float32)
    phases = _build_phases(x_nhwc, stride, cin_p)
    taps, sc_tap = _tap_map(stride)
    w1f = _fused_conv3x3_weight(params["w1"], cin_p, cout_p)
    w2f = _fused_conv3x3_weight(params["w2"], cout_p, cout_p)

    grid = (T,)
    cparams = pltpu.CompilerParams(dimension_semantics=("parallel",))

    def full_spec(arr):
        nd = arr.ndim
        return pl.BlockSpec(arr.shape, lambda i, _n=nd: (0,) * _n)

    ph_shape = phases[0].shape
    phase_spec = pl.BlockSpec((nb,) + ph_shape[1:], lambda i: (i, 0, 0, 0))
    row_spec = pl.BlockSpec((mb, cout_p), lambda i: (i, 0))        # lane-dense output
    stat_spec = pl.BlockSpec((1, 2, cout_p), lambda i: (i, 0, 0))
    vec_spec = pl.BlockSpec((1, cout_p), lambda i: (0, 0))

    # -------- pass A: conv1 (+ projection 1x1 conv) + BN partial statistics --------
    a_inputs = list(phases) + [w1f]
    a_in_specs = [phase_spec] * len(phases) + [full_spec(w1f)]
    a_out_shape = [jax.ShapeDtypeStruct((M, cout_p), jnp.float32),
                   jax.ShapeDtypeStruct((T, 2, cout_p), jnp.float32)]
    a_out_specs = [row_spec, stat_spec]
    if has_proj:
        wscf = _proj_weight(params["wsc"], cin_p, cout_p)
        a_inputs += [wscf]
        a_in_specs += [full_spec(wscf)]
        a_out_shape += [jax.ShapeDtypeStruct((M, cout_p), jnp.float32),
                        jax.ShapeDtypeStruct((T, 2, cout_p), jnp.float32)]
        a_out_specs += [row_spec, stat_spec]
    a_out = pl.pallas_call(
        _make_conv1_kernel(nb, Ho, Wo, cin_p, cout_p, taps, sc_tap, has_proj,
                           len(phases)),
        grid=grid,
        in_specs=a_in_specs,
        out_specs=a_out_specs,
        out_shape=a_out_shape,
        scratch_shapes=[pltpu.VMEM((mb, 9 * cin_p), _MXU_DTYPE)],
        compiler_params=cparams,
    )(*a_inputs)
    if has_proj:
        y1, st1, ysc, stsc = a_out
    else:
        y1, st1 = a_out

    # -------- pass B: BN1 + ReLU -> conv2 + BN partial statistics --------
    scale1, shift1 = _bn_affine(st1, params["g1"], params["b1"], M, Cout, cout_p)
    y2, st2 = pl.pallas_call(
        _make_conv2_kernel(nb, Ho, Wo, cout_p),
        grid=grid,
        in_specs=[row_spec, vec_spec, vec_spec, full_spec(w2f)],
        out_specs=[row_spec, stat_spec],
        out_shape=[jax.ShapeDtypeStruct((M, cout_p), jnp.float32),
                   jax.ShapeDtypeStruct((T, 2, cout_p), jnp.float32)],
        scratch_shapes=[pltpu.VMEM((nb, Ho + 2, Wo + 2, cout_p), _MXU_DTYPE),
                        pltpu.VMEM((mb, 9 * cout_p), _MXU_DTYPE)],
        compiler_params=cparams,
    )(y1, scale1, shift1, w2f)

    # -------- pass C: BN2 (+ BN_sc) + residual add + final ReLU --------
    scale2, shift2 = _bn_affine(st2, params["g2"], params["b2"], M, Cout, cout_p)
    if has_proj:
        scale_sc, shift_sc = _bn_affine(stsc, params["gsc"], params["bsc"],
                                        M, Cout, cout_p)
        c_inputs = [y2, ysc, scale2, shift2, scale_sc, shift_sc]
        c_specs = [row_spec, row_spec, vec_spec, vec_spec, vec_spec, vec_spec]
    else:
        # Identity shortcut: reuse x itself (channel-padded) -- no duplicated
        # shortcut activation, no projection conv / BN.
        x_id = jnp.pad(x_nhwc, ((0, 0), (0, 0), (0, 0), (0, cout_p - Cin)))
        c_inputs = [y2, x_id.reshape(M, cout_p), scale2, shift2]
        c_specs = [row_spec, row_spec, vec_spec, vec_spec]
    out2d = pl.pallas_call(
        _make_combine_kernel(has_proj),
        grid=grid,
        in_specs=c_specs,
        out_specs=row_spec,
        out_shape=jax.ShapeDtypeStruct((M, cout_p), jnp.float32),
        compiler_params=cparams,
    )(*c_inputs)

    out = out2d[:, :Cout].reshape(N, Ho, Wo, Cout)
    return jnp.transpose(out, (0, 3, 1, 2))                       # back to NCHW


# ---------------------------------------------------------------------------
# test / reference
# ---------------------------------------------------------------------------

def init_params(key, Cin, Cout, has_proj):
    ks = jax.random.split(key, 9)
    p = {
        "w1": 0.2 * jax.random.normal(ks[0], (Cout, Cin, 3, 3), jnp.float32),
        "g1": 1.0 + 0.1 * jax.random.normal(ks[1], (Cout,), jnp.float32),
        "b1": 0.1 * jax.random.normal(ks[2], (Cout,), jnp.float32),
        "w2": 0.2 * jax.random.normal(ks[3], (Cout, Cout, 3, 3), jnp.float32),
        "g2": 1.0 + 0.1 * jax.random.normal(ks[4], (Cout,), jnp.float32),
        "b2": 0.1 * jax.random.normal(ks[5], (Cout,), jnp.float32),
    }
    if has_proj:
        p["wsc"] = 0.2 * jax.random.normal(ks[6], (Cout, Cin, 1, 1), jnp.float32)
        p["gsc"] = 1.0 + 0.1 * jax.random.normal(ks[7], (Cout,), jnp.float32)
        p["bsc"] = 0.1 * jax.random.normal(ks[8], (Cout,), jnp.float32)
    return p


def reference(x, params, stride, mxu_dtype=None):
    """Pure-JAX replica of the PyTorch forward (training-mode BatchNorm).
    If mxu_dtype is set, conv operands are rounded to it (with f32 accumulation),
    mirroring the kernel's bf16 MXU precision."""
    _, Cin, _, _ = x.shape
    Cout = params["w1"].shape[0]
    has_proj = (stride != 1) or (Cin != Cout)

    def rnd(a):
        return a.astype(mxu_dtype).astype(jnp.float32) if mxu_dtype is not None else a

    def conv(y, w, s, pad):
        return jax.lax.conv_general_dilated(
            rnd(y), rnd(w), (s, s), [(pad, pad), (pad, pad)],
            dimension_numbers=("NCHW", "OIHW", "NCHW"),
            precision=jax.lax.Precision.HIGHEST)

    def bn(y, g, b):
        mean = jnp.mean(y, axis=(0, 2, 3), keepdims=True)
        var = jnp.mean((y - mean) ** 2, axis=(0, 2, 3), keepdims=True)
        return ((y - mean) / jnp.sqrt(var + _EPS)) * g.reshape(1, -1, 1, 1) \
            + b.reshape(1, -1, 1, 1)

    out = jax.nn.relu(bn(conv(x, params["w1"], stride, 1), params["g1"], params["b1"]))
    out = bn(conv(out, params["w2"], 1, 1), params["g2"], params["b2"])
    if has_proj:
        sc = bn(conv(x, params["wsc"], stride, 0), params["gsc"], params["bsc"])
    else:
        sc = x
    return jax.nn.relu(out + sc)


if __name__ == "__main__":
    key = jax.random.PRNGKey(0)
    configs = [
        # (N, Cin, Cout, H, W, stride)
        (2, 4, 8, 16, 16, 2),   # projection shortcut (stride 2 + channel change)
        (2, 8, 8, 16, 16, 1),   # identity shortcut
    ]
    for idx, (N, Cin, Cout, H, W, stride) in enumerate(configs):
        kx, kp = jax.random.split(jax.random.fold_in(key, idx))
        x = jax.random.normal(kx, (N, Cin, H, W), jnp.float32)
        has_proj = (stride != 1) or (Cin != Cout)
        params = init_params(kp, Cin, Cout, has_proj)

        ref_mxu = jax.block_until_ready(reference(x, params, stride, mxu_dtype=_MXU_DTYPE))
        ref_f32 = jax.block_until_ready(reference(x, params, stride))

        # rows_per_tile=64 -> multi-step grid at these toy shapes; 512 = default tile
        for rows_per_tile in (64, 512):
            out = jax.block_until_ready(
                residual_block(x, params, stride, rows_per_tile=rows_per_tile))
            assert out.shape == (N, Cout, H // stride, W // stride), out.shape
            # primary: matches the module evaluated at MXU (bf16 operand) precision
            err = float(jnp.max(jnp.abs(out - ref_mxu)))
            assert jnp.allclose(out, ref_mxu, atol=5e-3, rtol=5e-3), err
            # sanity: stays inside the bf16-rounding envelope of the full-f32 forward
            err32 = float(jnp.max(jnp.abs(out - ref_f32)))
            assert jnp.allclose(out, ref_f32, atol=5e-2, rtol=5e-2), err32

    print("KERNEL_OK")
</pallas_src>

<mosaic_0001>
module attributes {stable_mosaic.version = 11 : i64} {
  func.func @kernel(%arg0: i32, %arg1: memref<1x9x9x128xbf16, #tpu.memory_space<vmem>>, %arg2: memref<1x9x9x128xbf16, #tpu.memory_space<vmem>>, %arg3: memref<1x9x9x128xbf16, #tpu.memory_space<vmem>>, %arg4: memref<1x9x9x128xbf16, #tpu.memory_space<vmem>>, %arg5: memref<1152x128xbf16, #tpu.memory_space<vmem>>, %arg6: memref<128x128xbf16, #tpu.memory_space<vmem>>, %arg7: memref<64x128xf32, #tpu.memory_space<vmem>>, %arg8: memref<1x2x128xf32, #tpu.memory_space<vmem>>, %arg9: memref<64x128xf32, #tpu.memory_space<vmem>>, %arg10: memref<1x2x128xf32, #tpu.memory_space<vmem>>, %arg11: memref<64x1152xbf16, #tpu.memory_space<vmem>>) attributes {dimension_semantics = [#tpu.dimension_semantics<parallel>], iteration_bounds = array<i64: 2>, scalar_prefetch = 0 : i64, scratch_operands = 1 : i64, tpu.core_type = #tpu.core_type<tc>, window_params = [{transform_indices = @transform_0, window_bounds = array<i64: 1, 9, 9, 128>}, {transform_indices = @transform_1, window_bounds = array<i64: 1, 9, 9, 128>}, {transform_indices = @transform_2, window_bounds = array<i64: 1, 9, 9, 128>}, {transform_indices = @transform_3, window_bounds = array<i64: 1, 9, 9, 128>}, {pipeline_mode = #tpu.pipeline_mode<synchronous>, transform_indices = @transform_4, window_bounds = array<i64: 1152, 128>}, {pipeline_mode = #tpu.pipeline_mode<synchronous>, transform_indices = @transform_5, window_bounds = array<i64: 128, 128>}, {transform_indices = @transform_6, window_bounds = array<i64: 64, 128>}, {transform_indices = @transform_7, window_bounds = array<i64: 1, 2, 128>}, {transform_indices = @transform_8, window_bounds = array<i64: 64, 128>}, {transform_indices = @transform_9, window_bounds = array<i64: 1, 2, 128>}]} {
    %c0 = arith.constant 0 : index
    %c0_0 = arith.constant 0 : index
    %c0_1 = arith.constant 0 : index
    %c0_2 = arith.constant 0 : index
    %0 = vector.load %arg1[%c0, %c0_0, %c0_1, %c0_2] : memref<1x9x9x128xbf16, #tpu.memory_space<vmem>>, vector<1x8x8x128xbf16>
    %1 = vector.shape_cast %0 : vector<1x8x8x128xbf16> to vector<64x128xbf16>
    %c0_3 = arith.constant 0 : index
    %c0_4 = arith.constant 0 : index
    %2 = vector.load %arg11[%c0_3, %c0_4] : memref<64x1152xbf16, #tpu.memory_space<vmem>>, vector<64x128xbf16>
    tpu.vector_store %arg11[%c0_3, %c0_4], %1 {strides = array<i32>} : memref<64x1152xbf16, #tpu.memory_space<vmem>>, vector<64x128xbf16>,
    %c0_5 = arith.constant 0 : index
    %c0_6 = arith.constant 0 : index
    %c0_7 = arith.constant 0 : index
    %c0_8 = arith.constant 0 : index
    %3 = vector.load %arg2[%c0_5, %c0_6, %c0_7, %c0_8] : memref<1x9x9x128xbf16, #tpu.memory_space<vmem>>, vector<1x8x8x128xbf16>
    %4 = vector.shape_cast %3 : vector<1x8x8x128xbf16> to vector<64x128xbf16>
    %c0_9 = arith.constant 0 : index
    %c128 = arith.constant 128 : index
    %5 = vector.load %arg11[%c0_9, %c128] : memref<64x1152xbf16, #tpu.memory_space<vmem>>, vector<64x128xbf16>
    tpu.vector_store %arg11[%c0_9, %c128], %4 {strides = array<i32>} : memref<64x1152xbf16, #tpu.memory_space<vmem>>, vector<64x128xbf16>,
    %c0_10 = arith.constant 0 : index
    %c0_11 = arith.constant 0 : index
    %c1 = arith.constant 1 : index
    %c0_12 = arith.constant 0 : index
    %6 = vector.load %arg1[%c0_10, %c0_11, %c1, %c0_12] : memref<1x9x9x128xbf16, #tpu.memory_space<vmem>>, vector<1x8x8x128xbf16>
    %7 = vector.shape_cast %6 : vector<1x8x8x128xbf16> to vector<64x128xbf16>
    %c0_13 = arith.constant 0 : index
    %c256 = arith.constant 256 : index
    %8 = vector.load %arg11[%c0_13, %c256] : memref<64x1152xbf16, #tpu.memory_space<vmem>>, vector<64x128xbf16>
    tpu.vector_store %arg11[%c0_13, %c256], %7 {strides = array<i32>} : memref<64x1152xbf16, #tpu.memory_space<vmem>>, vector<64x128xbf16>,
    %c0_14 = arith.constant 0 : index
    %c0_15 = arith.constant 0 : index
    %c0_16 = arith.constant 0 : index
    %c0_17 = arith.constant 0 : index
    %9 = vector.load %arg3[%c0_14, %c0_15, %c0_16, %c0_17] : memref<1x9x9x128xbf16, #tpu.memory_space<vmem>>, vector<1x8x8x128xbf16>
    %10 = vector.shape_cast %9 : vector<1x8x8x128xbf16> to vector<64x128xbf16>
    %c0_18 = arith.constant 0 : index
    %c384 = arith.constant 384 : index
    %11 = vector.load %arg11[%c0_18, %c384] : memref<64x1152xbf16, #tpu.memory_space<vmem>>, vector<64x128xbf16>
    tpu.vector_store %arg11[%c0_18, %c384], %10 {strides = array<i32>} : memref<64x1152xbf16, #tpu.memory_space<vmem>>, vector<64x128xbf16>,
    %c0_19 = arith.constant 0 : index
    %c0_20 = arith.constant 0 : index
    %c0_21 = arith.constant 0 : index
    %c0_22 = arith.constant 0 : index
    %12 = vector.load %arg4[%c0_19, %c0_20, %c0_21, %c0_22] : memref<1x9x9x128xbf16, #tpu.memory_space<vmem>>, vector<1x8x8x128xbf16>
    %13 = vector.shape_cast %12 : vector<1x8x8x128xbf16> to vector<64x128xbf16>
    %c0_23 = arith.constant 0 : index
    %c512 = arith.constant 512 : index
    %14 = vector.load %arg11[%c0_23, %c512] : memref<64x1152xbf16, #tpu.memory_space<vmem>>, vector<64x128xbf16>
    tpu.vector_store %arg11[%c0_23, %c512], %13 {strides = array<i32>} : memref<64x1152xbf16, #tpu.memory_space<vmem>>, vector<64x128xbf16>,
    %c0_24 = arith.constant 0 : index
    %c0_25 = arith.constant 0 : index
    %c1_26 = arith.constant 1 : index
    %c0_27 = arith.constant 0 : index
    %15 = vector.load %arg3[%c0_24, %c0_25, %c1_26, %c0_27] : memref<1x9x9x128xbf16, #tpu.memory_space<vmem>>, vector<1x8x8x128xbf16>
    %16 = vector.shape_cast %15 : vector<1x8x8x128xbf16> to vector<64x128xbf16>
    %c0_28 = arith.constant 0 : index
    %c640 = arith.constant 640 : index
    %17 = vector.load %arg11[%c0_28, %c640] : memref<64x1152xbf16, #tpu.memory_space<vmem>>, vector<64x128xbf16>
    tpu.vector_store %arg11[%c0_28, %c640], %16 {strides = array<i32>} : memref<64x1152xbf16, #tpu.memory_space<vmem>>, vector<64x128xbf16>,
    %c0_29 = arith.constant 0 : index
    %c1_30 = arith.constant 1 : index
    %c0_31 = arith.constant 0 : index
    %c0_32 = arith.constant 0 : index
    %18 = vector.load %arg1[%c0_29, %c1_30, %c0_31, %c0_32] : memref<1x9x9x128xbf16, #tpu.memory_space<vmem>>, vector<1x8x8x128xbf16>
    %19 = vector.shape_cast %18 : vector<1x8x8x128xbf16> to vector<64x128xbf16>
    %c0_33 = arith.constant 0 : index
    %c768 = arith.constant 768 : index
    %20 = vector.load %arg11[%c0_33, %c768] : memref<64x1152xbf16, #tpu.memory_space<vmem>>, vector<64x128xbf16>
    tpu.vector_store %arg11[%c0_33, %c768], %19 {strides = array<i32>} : memref<64x1152xbf16, #tpu.memory_space<vmem>>, vector<64x128xbf16>,
    %c0_34 = arith.constant 0 : index
    %c1_35 = arith.constant 1 : index
    %c0_36 = arith.constant 0 : index
    %c0_37 = arith.constant 0 : index
    %21 = vector.load %arg2[%c0_34, %c1_35, %c0_36, %c0_37] : memref<1x9x9x128xbf16, #tpu.memory_space<vmem>>, vector<1x8x8x128xbf16>
    %22 = vector.shape_cast %21 : vector<1x8x8x128xbf16> to vector<64x128xbf16>
    %c0_38 = arith.constant 0 : index
    %c896 = arith.constant 896 : index
    %23 = vector.load %arg11[%c0_38, %c896] : memref<64x1152xbf16, #tpu.memory_space<vmem>>, vector<64x128xbf16>
    tpu.vector_store %arg11[%c0_38, %c896], %22 {strides = array<i32>} : memref<64x1152xbf16, #tpu.memory_space<vmem>>, vector<64x128xbf16>,
    %c0_39 = arith.constant 0 : index
    %c1_40 = arith.constant 1 : index
    %c1_41 = arith.constant 1 : index
    %c0_42 = arith.constant 0 : index
    %24 = vector.load %arg1[%c0_39, %c1_40, %c1_41, %c0_42] : memref<1x9x9x128xbf16, #tpu.memory_space<vmem>>, vector<1x8x8x128xbf16>
    %25 = vector.shape_cast %24 : vector<1x8x8x128xbf16> to vector<64x128xbf16>
    %c0_43 = arith.constant 0 : index
    %c1024 = arith.constant 1024 : index
    %26 = vector.load %arg11[%c0_43, %c1024] : memref<64x1152xbf16, #tpu.memory_space<vmem>>, vector<64x128xbf16>
    tpu.vector_store %arg11[%c0_43, %c1024], %25 {strides = array<i32>} : memref<64x1152xbf16, #tpu.memory_space<vmem>>, vector<64x128xbf16>,
    %c0_44 = arith.constant 0 : index
    %c0_45 = arith.constant 0 : index
    %27 = vector.load %arg11[%c0_44, %c0_45] : memref<64x1152xbf16, #tpu.memory_space<vmem>>, vector<64x1152xbf16>
    %c0_46 = arith.constant 0 : index
    %c0_47 = arith.constant 0 : index
    %28 = vector.load %arg5[%c0_46, %c0_47] : memref<1152x128xbf16, #tpu.memory_space<vmem>>, vector<1152x128xbf16>
    %cst = arith.constant dense<0.000000e+00> : vector<64x128xf32>
    %29 = tpu.matmul %27, %28, %cst {dimension_numbers = #tpu.dot_dimension_numbers<[1], [0], [0], [1], [0, 0, 1, 1], [], []>} : vector<64x1152xbf16>, vector<1152x128xbf16>, vector<64x128xf32> -> vector<64x128xf32>
    %c0_48 = arith.constant 0 : index
    %c0_49 = arith.constant 0 : index
    %30 = vector.load %arg7[%c0_48, %c0_49] : memref<64x128xf32, #tpu.memory_space<vmem>>, vector<64x128xf32>
    tpu.vector_store %arg7[%c0_48, %c0_49], %29 {strides = array<i32>} : memref<64x128xf32, #tpu.memory_space<vmem>>, vector<64x128xf32>,
    %cst_50 = arith.constant dense<0.000000e+00> : vector<128xf32>
    %31 = vector.multi_reduction <add>, %29, %cst_50 [0] : vector<64x128xf32> to vector<128xf32>
    %32 = vector.shape_cast %31 : vector<128xf32> to vector<1x128xf32>
    %33 = vector.shape_cast %32 : vector<1x128xf32> to vector<1x1x128xf32>
    %c0_51 = arith.constant 0 : index
    %c0_52 = arith.constant 0 : index
    %c0_53 = arith.constant 0 : index
    %34 = vector.load %arg8[%c0_51, %c0_52, %c0_53] : memref<1x2x128xf32, #tpu.memory_space<vmem>>, vector<1x1x128xf32>
    tpu.vector_store %arg8[%c0_51, %c0_52, %c0_53], %33 {strides = array<i32>} : memref<1x2x128xf32, #tpu.memory_space<vmem>>, vector<1x1x128xf32>,
    %35 = arith.mulf %29, %29 : vector<64x128xf32>
    %cst_54 = arith.constant dense<0.000000e+00> : vector<128xf32>
    %36 = vector.multi_reduction <add>, %35, %cst_54 [0] : vector<64x128xf32> to vector<128xf32>
    %37 = vector.shape_cast %36 : vector<128xf32> to vector<1x128xf32>
    %38 = vector.shape_cast %37 : vector<1x128xf32> to vector<1x1x128xf32>
    %c0_55 = arith.constant 0 : index
    %c1_56 = arith.constant 1 : index
    %c0_57 = arith.constant 0 : index
    %39 = vector.load %arg8[%c0_55, %c1_56, %c0_57] : memref<1x2x128xf32, #tpu.memory_space<vmem>>, vector<1x1x128xf32>
    tpu.vector_store %arg8[%c0_55, %c1_56, %c0_57], %38 {strides = array<i32>} : memref<1x2x128xf32, #tpu.memory_space<vmem>>, vector<1x1x128xf32>,
    %c0_58 = arith.constant 0 : index
    %c0_59 = arith.constant 0 : index
    %c0_60 = arith.constant 0 : index
    %c0_61 = arith.constant 0 : index
    %40 = vector.load %arg4[%c0_58, %c0_59, %c0_60, %c0_61] : memref<1x9x9x128xbf16, #tpu.memory_space<vmem>>, vector<1x8x8x128xbf16>
    %41 = vector.shape_cast %40 : vector<1x8x8x128xbf16> to vector<64x128xbf16>
    %c0_62 = arith.constant 0 : index
    %c0_63 = arith.constant 0 : index
    %42 = vector.load %arg6[%c0_62, %c0_63] : memref<128x128xbf16, #tpu.memory_space<vmem>>, vector<128x128xbf16>
    %cst_64 = arith.constant dense<0.000000e+00> : vector<64x128xf32>
    %43 = tpu.matmul %41, %42, %cst_64 {dimension_numbers = #tpu.dot_dimension_numbers<[1], [0], [0], [1], [0, 0, 1, 1], [], []>} : vector<64x128xbf16>, vector<128x128xbf16>, vector<64x128xf32> -> vector<64x128xf32>
    %c0_65 = arith.constant 0 : index
    %c0_66 = arith.constant 0 : index
    %44 = vector.load %arg9[%c0_65, %c0_66] : memref<64x128xf32, #tpu.memory_space<vmem>>, vector<64x128xf32>
    tpu.vector_store %arg9[%c0_65, %c0_66], %43 {strides = array<i32>} : memref<64x128xf32, #tpu.memory_space<vmem>>, vector<64x128xf32>,
    %cst_67 = arith.constant dense<0.000000e+00> : vector<128xf32>
    %45 = vector.multi_reduction <add>, %43, %cst_67 [0] : vector<64x128xf32> to vector<128xf32>
    %46 = vector.shape_cast %45 : vector<128xf32> to vector<1x128xf32>
    %47 = vector.shape_cast %46 : vector<1x128xf32> to vector<1x1x128xf32>
    %c0_68 = arith.constant 0 : index
    %c0_69 = arith.constant 0 : index
    %c0_70 = arith.constant 0 : index
    %48 = vector.load %arg10[%c0_68, %c0_69, %c0_70] : memref<1x2x128xf32, #tpu.memory_space<vmem>>, vector<1x1x128xf32>
    tpu.vector_store %arg10[%c0_68, %c0_69, %c0_70], %47 {strides = array<i32>} : memref<1x2x128xf32, #tpu.memory_space<vmem>>, vector<1x1x128xf32>,
    %49 = arith.mulf %43, %43 : vector<64x128xf32>
    %cst_71 = arith.constant dense<0.000000e+00> : vector<128xf32>
    %50 = vector.multi_reduction <add>, %49, %cst_71 [0] : vector<64x128xf32> to vector<128xf32>
    %51 = vector.shape_cast %50 : vector<128xf32> to vector<1x128xf32>
    %52 = vector.shape_cast %51 : vector<1x128xf32> to vector<1x1x128xf32>
    %c0_72 = arith.constant 0 : index
    %c1_73 = arith.constant 1 : index
    %c0_74 = arith.constant 0 : index
    %53 = vector.load %arg10[%c0_72, %c1_73, %c0_74] : memref<1x2x128xf32, #tpu.memory_space<vmem>>, vector<1x1x128xf32>
    tpu.vector_store %arg10[%c0_72, %c1_73, %c0_74], %52 {strides = array<i32>} : memref<1x2x128xf32, #tpu.memory_space<vmem>>, vector<1x1x128xf32>,
    return
  }
  func.func @transform_0(%arg0: i32) -> (i32, i32, i32, i32) {
    %c0_i32 = arith.constant 0 : i32
    %c0_i32_0 = arith.constant 0 : i32
    %c0_i32_1 = arith.constant 0 : i32
    %c0_i32_2 = arith.constant 0 : i32
    return %arg0, %c0_i32, %c0_i32_0, %c0_i32_1 : i32, i32, i32, i32
  }
  func.func @transform_1(%arg0: i32) -> (i32, i32, i32, i32) {
    %c0_i32 = arith.constant 0 : i32
    %c0_i32_0 = arith.constant 0 : i32
    %c0_i32_1 = arith.constant 0 : i32
    %c0_i32_2 = arith.constant 0 : i32
    return %arg0, %c0_i32, %c0_i32_0, %c0_i32_1 : i32, i32, i32, i32
  }
  func.func @transform_2(%arg0: i32) -> (i32, i32, i32, i32) {
    %c0_i32 = arith.constant 0 : i32
    %c0_i32_0 = arith.constant 0 : i32
    %c0_i32_1 = arith.constant 0 : i32
    %c0_i32_2 = arith.constant 0 : i32
    return %arg0, %c0_i32, %c0_i32_0, %c0_i32_1 : i32, i32, i32, i32
  }
  func.func @transform_3(%arg0: i32) -> (i32, i32, i32, i32) {
    %c0_i32 = arith.constant 0 : i32
    %c0_i32_0 = arith.constant 0 : i32
    %c0_i32_1 = arith.constant 0 : i32
    %c0_i32_2 = arith.constant 0 : i32
    return %arg0, %c0_i32, %c0_i32_0, %c0_i32_1 : i32, i32, i32, i32
  }
  func.func @transform_4(%arg0: i32) -> (i32, i32) {
    %c0_i32 = arith.constant 0 : i32
    %c0_i32_0 = arith.constant 0 : i32
    %c0_i32_1 = arith.constant 0 : i32
    return %c0_i32, %c0_i32_0 : i32, i32
  }
  func.func @transform_5(%arg0: i32) -> (i32, i32) {
    %c0_i32 = arith.constant 0 : i32
    %c0_i32_0 = arith.constant 0 : i32
    %c0_i32_1 = arith.constant 0 : i32
    return %c0_i32, %c0_i32_0 : i32, i32
  }
  func.func @transform_6(%arg0: i32) -> (i32, i32) {
    %c0_i32 = arith.constant 0 : i32
    %c0_i32_0 = arith.constant 0 : i32
    return %arg0, %c0_i32 : i32, i32
  }
  func.func @transform_7(%arg0: i32) -> (i32, i32, i32) {
    %c0_i32 = arith.constant 0 : i32
    %c0_i32_0 = arith.constant 0 : i32
    %c0_i32_1 = arith.constant 0 : i32
    return %arg0, %c0_i32, %c0_i32_0 : i32, i32, i32
  }
  func.func @transform_8(%arg0: i32) -> (i32, i32) {
    %c0_i32 = arith.constant 0 : i32
    %c0_i32_0 = arith.constant 0 : i32
    return %arg0, %c0_i32 : i32, i32
  }
  func.func @transform_9(%arg0: i32) -> (i32, i32, i32) {
    %c0_i32 = arith.constant 0 : i32
    %c0_i32_0 = arith.constant 0 : i32
    %c0_i32_1 = arith.constant 0 : i32
    return %arg0, %c0_i32, %c0_i32_0 : i32, i32, i32
  }
}

</mosaic_0001>

<llo_original>
// kernel: tpu_custom_call.1
$region0: #{tpu_custom_call.1}
  #allocation0 [shape = 'u32[]', space=smem, size = 0x4, offset = 0x4, fixed_abs, tag = 'smem constant byte address 0x4 - core index']
  #allocation1 [shape = 'u32[144,128]{1,0:T(1,128)}', space=vmem, size = 0x12000, scoped, tag = 'internal scratch']
  #allocation2 [shape = 'bf16[64,1152]{1,0:T(16,128)(2,1)}', space=vmem, size = 0x24000, scoped, tag = 'scratch operand']
  %s0 = inlined_call_operand.vmem [shape: bf16[2,9,9,128], index: 0, kind: input, shape index: {}]
  %s1 = inlined_call_operand.vmem [shape: bf16[2,9,9,128], index: 1, kind: input, shape index: {}]
  %s2 = inlined_call_operand.vmem [shape: bf16[2,9,9,128], index: 2, kind: input, shape index: {}]
  %s3 = inlined_call_operand.vmem [shape: bf16[2,9,9,128], index: 3, kind: input, shape index: {}]
  %s4 = inlined_call_operand.vmem [shape: bf16[1152,128], index: 4, kind: input, shape index: {}]
  %s5 = inlined_call_operand.vmem [shape: bf16[128,128], index: 5, kind: input, shape index: {}]
  %s6 = inlined_call_operand.hbm [shape: f32[128,128], index: 6, kind: output, shape index: {0}]
  %s7 = inlined_call_operand.hbm [shape: f32[2,2,128], index: 7, kind: output, shape index: {1}]
  %s8 = inlined_call_operand.hbm [shape: f32[128,128], index: 8, kind: output, shape index: {2}]
  %s9 = inlined_call_operand.hbm [shape: f32[2,2,128], index: 9, kind: output, shape index: {3}]
  %10 = xla_tuple %s6, %s7, %s8, %s9
  %s11 = sld [smem:[#allocation0]]
  $region81: #{tpu_custom_call.1} parent=0
    _
  %s13 = ssub.s32 1, %s11
  %s14 = scalar_select 0, %s13, %s11
  $region1: #{tpu_custom_call.1} parent=0
    #allocation3 [shape = 'u8[65536]{0}', space=vmem, size = 0x10000, scoped, tag = 'output window, operand 0']
    #allocation4 [shape = 's32[2]{0}', space=sflag, size = 0x8, scoped, tag = 'scoped memory for tpu_custom_call.1']
    #allocation5 [shape = 'u8[2048]{0}', space=vmem, size = 0x800, scoped, tag = 'output window, operand 1']
    #allocation6 [shape = 's32[2]{0}', space=sflag, size = 0x8, scoped, tag = 'scoped memory for tpu_custom_call.1']
    #allocation7 [shape = 'u8[65536]{0}', space=vmem, size = 0x10000, scoped, tag = 'output window, operand 2']
    #allocation8 [shape = 'u8[2048]{0}', space=vmem, size = 0x800, scoped, tag = 'output window, operand 3']
    #allocation9 [shape = 's32[2]{0}', space=sflag, size = 0x8, scoped, tag = 'scoped memory for tpu_custom_call.1']
    %15 = vsyncpa [#allocation4], 0
    %s16 = scalar_lea.sflag [#allocation4], 1
    %17 = vsyncpa %s16, 0
    %18 = vsyncpa [#allocation6], 0
    %s19 = scalar_lea.sflag [#allocation6], 1
    %20 = vsyncpa %s19, 0
    %21 = vsyncpa [#allocation9], 0
    %s22 = scalar_lea.sflag [#allocation9], 1
    %23 = vsyncpa %s22, 0
    loop: start=0, step=1, limit=4
    $region2: #{tpu_custom_call.1} parent=1 // loop_pre_header
      _
    $region3: #{tpu_custom_call.1} parent=1 // loop_header
      %s25 = sphi 0, %s29
      %p26 = scmp.ge.s32.totalorder %s25, 4
      %s35 = sphi 0, %s37
      %s38 = sphi 0, %s35
      %s39 = sphi 0, %s38
      %s55 = sphi 0, %s39
      %s61 = sphi 0, %s63
      %s64 = sphi 0, %s61
      %s65 = sphi 0, %s64
      %s81 = sphi 0, %s65
      %s87 = sphi 0, %s89
      %s90 = sphi 0, %s87
      %s91 = sphi 0, %s90
      %s107 = sphi 0, %s91
      %s113 = sphi 0, %s115
      %s116 = sphi 0, %s113
      %s117 = sphi 0, %s116
      %s133 = sphi 0, %s117
      %s137 = sphi 0, %s137
      %s139 = sphi 0, %s137
      %s140 = sphi 0, %s139
      %s154 = sphi 0, %s140
      %s158 = sphi 0, %s158
      %s160 = sphi 0, %s158
      %s161 = sphi 0, %s160
      %s175 = sphi 0, %s161
      %s181 = sphi 0, %s183
      %s184 = sphi 0, %s181
      %s185 = sphi 0, %s184
      %s201 = sphi 0, %s185
      %s207 = sphi 0, %s209
      %s210 = sphi 0, %s207
      %s211 = sphi 0, %s210
      %s227 = sphi 0, %s211
      %s233 = sphi 0, %s235
      %s236 = sphi 0, %s233
      %s237 = sphi 0, %s236
      %s253 = sphi 0, %s237
      %s259 = sphi 0, %s261
      %s262 = sphi 0, %s259
      %s263 = sphi 0, %s262
      %s279 = sphi 0, %s263
    $region4: #{tpu_custom_call.1} parent=1 // loop_header_branch
      %28 = sbr.rel (%p26) target = $region8
    $region5: #{tpu_custom_call.1} parent=1 // loop_body
      %s30 = ssub.s32 %s25, 1
      %s31 = ssub.s32 %s25, 2
      %s32 = sadd.s32 %s25, 1
      %s33 = ssub.s32 %s25, %s32
      %p34 = scmp.eq.s32.totalorder %s33, 0
      %s36 = sadd.s32 %s35, 1
      %s37 = scalar_select %p34, %s35, %s36
      %p40 = pneg %p34
      %p41 = scmp.eq.s32.totalorder %s25, 1
      %p42 = por %p40, %p41
      %p43 = scmp.ne.s32.totalorder %s35, %s38
      %p44 = scmp.eq.s32.totalorder %s25, 0
      %p45 = por %p43, %p44
      %p46 = scmp.ne.s32.totalorder %s35, %s38
      %p47 = scmp.eq.s32.totalorder %s30, 1
      %p48 = por %p46, %p47
      %p49 = scmp.ne.s32.totalorder %s38, %s39
      %p50 = scmp.eq.s32.totalorder %s30, 0
      %p51 = por %p49, %p50
      %p52 = scmp.ne.s32.totalorder %s38, %s39
      %p53 = scmp.eq.s32.totalorder %s31, 1
      %p54 = por %p52, %p53
      %p56 = scmp.ne.s32.totalorder %s39, %s55
      %p57 = scmp.eq.s32.totalorder %s31, 0
      %p58 = por %p56, %p57
      %s59 = ssub.s32 %s25, %s32
      %p60 = scmp.eq.s32.totalorder %s59, 0
      %s62 = sadd.s32 %s61, 1
      %s63 = scalar_select %p60, %s61, %s62
      %p66 = pneg %p60
      %p67 = scmp.eq.s32.totalorder %s25, 1
      %p68 = por %p66, %p67
      %p69 = scmp.ne.s32.totalorder %s61, %s64
      %p70 = scmp.eq.s32.totalorder %s25, 0
      %p71 = por %p69, %p70
      %p72 = scmp.ne.s32.totalorder %s61, %s64
      %p73 = scmp.eq.s32.totalorder %s30, 1
      %p74 = por %p72, %p73
      %p75 = scmp.ne.s32.totalorder %s64, %s65
      %p76 = scmp.eq.s32.totalorder %s30, 0
      %p77 = por %p75, %p76
      %p78 = scmp.ne.s32.totalorder %s64, %s65
      %p79 = scmp.eq.s32.totalorder %s31, 1
      %p80 = por %p78, %p79
      %p82 = scmp.ne.s32.totalorder %s65, %s81
      %p83 = scmp.eq.s32.totalorder %s31, 0
      %p84 = por %p82, %p83
      %s85 = ssub.s32 %s25, %s32
      %p86 = scmp.eq.s32.totalorder %s85, 0
      %s88 = sadd.s32 %s87, 1
      %s89 = scalar_select %p86, %s87, %s88
      %p92 = pneg %p86
      %p93 = scmp.eq.s32.totalorder %s25, 1
      %p94 = por %p92, %p93
      %p95 = scmp.ne.s32.totalorder %s87, %s90
      %p96 = scmp.eq.s32.totalorder %s25, 0
      %p97 = por %p95, %p96
      %p98 = scmp.ne.s32.totalorder %s87, %s90
      %p99 = scmp.eq.s32.totalorder %s30, 1
      %p100 = por %p98, %p99
      %p101 = scmp.ne.s32.totalorder %s90, %s91
      %p102 = scmp.eq.s32.totalorder %s30, 0
      %p103 = por %p101, %p102
      %p104 = scmp.ne.s32.totalorder %s90, %s91
      %p105 = scmp.eq.s32.totalorder %s31, 1
      %p106 = por %p104, %p105
      %p108 = scmp.ne.s32.totalorder %s91, %s107
      %p109 = scmp.eq.s32.totalorder %s31, 0
      %p110 = por %p108, %p109
      %s111 = ssub.s32 %s25, %s32
      %p112 = scmp.eq.s32.totalorder %s111, 0
      %s114 = sadd.s32 %s113, 1
      %s115 = scalar_select %p112, %s113, %s114
      %p118 = pneg %p112
      %p119 = scmp.eq.s32.totalorder %s25, 1
      %p120 = por %p118, %p119
      %p121 = scmp.ne.s32.totalorder %s113, %s116
      %p122 = scmp.eq.s32.totalorder %s25, 0
      %p123 = por %p121, %p122
      %p124 = scmp.ne.s32.totalorder %s113, %s116
      %p125 = scmp.eq.s32.totalorder %s30, 1
      %p126 = por %p124, %p125
      %p127 = scmp.ne.s32.totalorder %s116, %s117
      %p128 = scmp.eq.s32.totalorder %s30, 0
      %p129 = por %p127, %p128
      %p130 = scmp.ne.s32.totalorder %s116, %s117
      %p131 = scmp.eq.s32.totalorder %s31, 1
      %p132 = por %p130, %p131
      %p134 = scmp.ne.s32.totalorder %s117, %s133
      %p135 = scmp.eq.s32.totalorder %s31, 0
      %p136 = por %p134, %p135
      %s138 = sadd.s32 %s137, 1
      %p141 = scmp.eq.s32.totalorder %s25, 1
      %p142 = scmp.ne.s32.totalorder %s137, %s139
      %p143 = scmp.eq.s32.totalorder %s25, 0
      %p144 = por %p142, %p143
      %p145 = scmp.ne.s32.totalorder %s137, %s139
      %p146 = scmp.eq.s32.totalorder %s30, 1
      %p147 = por %p145, %p146
      %p148 = scmp.ne.s32.totalorder %s139, %s140
      %p149 = scmp.eq.s32.totalorder %s30, 0
      %p150 = por %p148, %p149
      %p151 = scmp.ne.s32.totalorder %s139, %s140
      %p152 = scmp.eq.s32.totalorder %s31, 1
      %p153 = por %p151, %p152
      %p155 = scmp.ne.s32.totalorder %s140, %s154
      %p156 = scmp.eq.s32.totalorder %s31, 0
      %p157 = por %p155, %p156
      %s159 = sadd.s32 %s158, 1
      %p162 = scmp.eq.s32.totalorder %s25, 1
      %p163 = scmp.ne.s32.totalorder %s158, %s160
      %p164 = scmp.eq.s32.totalorder %s25, 0
      %p165 = por %p163, %p164
      %p166 = scmp.ne.s32.totalorder %s158, %s160
      %p167 = scmp.eq.s32.totalorder %s30, 1
      %p168 = por %p166, %p167
      %p169 = scmp.ne.s32.totalorder %s160, %s161
      %p170 = scmp.eq.s32.totalorder %s30, 0
      %p171 = por %p169, %p170
      %p172 = scmp.ne.s32.totalorder %s160, %s161
      %p173 = scmp.eq.s32.totalorder %s31, 1
      %p174 = por %p172, %p173
      %p176 = scmp.ne.s32.totalorder %s161, %s175
      %p177 = scmp.eq.s32.totalorder %s31, 0
      %p178 = por %p176, %p177
      %s179 = ssub.s32 %s25, %s32
      %p180 = scmp.eq.s32.totalorder %s179, 0
      %s182 = sadd.s32 %s181, 1
      %s183 = scalar_select %p180, %s181, %s182
      %p186 = pneg %p180
      %p187 = scmp.eq.s32.totalorder %s25, 1
      %p188 = por %p186, %p187
      %p189 = scmp.ne.s32.totalorder %s181, %s184
      %p190 = scmp.eq.s32.totalorder %s25, 0
      %p191 = por %p189, %p190
      %p192 = scmp.ne.s32.totalorder %s181, %s184
      %p193 = scmp.eq.s32.totalorder %s30, 1
      %p194 = por %p192, %p193
      %p195 = scmp.ne.s32.totalorder %s184, %s185
      %p196 = scmp.eq.s32.totalorder %s30, 0
      %p197 = por %p195, %p196
      %p198 = scmp.ne.s32.totalorder %s184, %s185
      %p199 = scmp.eq.s32.totalorder %s31, 1
      %p200 = por %p198, %p199
      %p202 = scmp.ne.s32.totalorder %s185, %s201
      %p203 = scmp.eq.s32.totalorder %s31, 0
      %p204 = por %p202, %p203
      %s205 = ssub.s32 %s25, %s32
      %p206 = scmp.eq.s32.totalorder %s205, 0
      %s208 = sadd.s32 %s207, 1
      %s209 = scalar_select %p206, %s207, %s208
      %p212 = pneg %p206
      %p213 = scmp.eq.s32.totalorder %s25, 1
      %p214 = por %p212, %p213
      %p215 = scmp.ne.s32.totalorder %s207, %s210
      %p216 = scmp.eq.s32.totalorder %s25, 0
      %p217 = por %p215, %p216
      %p218 = scmp.ne.s32.totalorder %s207, %s210
      %p219 = scmp.eq.s32.totalorder %s30, 1
      %p220 = por %p218, %p219
      %p221 = scmp.ne.s32.totalorder %s210, %s211
      %p222 = scmp.eq.s32.totalorder %s30, 0
      %p223 = por %p221, %p222
      %p224 = scmp.ne.s32.totalorder %s210, %s211
      %p225 = scmp.eq.s32.totalorder %s31, 1
      %p226 = por %p224, %p225
      %p228 = scmp.ne.s32.totalorder %s211, %s227
      %p229 = scmp.eq.s32.totalorder %s31, 0
      %p230 = por %p228, %p229
      %s231 = ssub.s32 %s25, %s32
      %p232 = scmp.eq.s32.totalorder %s231, 0
      %s234 = sadd.s32 %s233, 1
      %s235 = scalar_select %p232, %s233, %s234
      %p238 = pneg %p232
      %p239 = scmp.eq.s32.totalorder %s25, 1
      %p240 = por %p238, %p239
      %p241 = scmp.ne.s32.totalorder %s233, %s236
      %p242 = scmp.eq.s32.totalorder %s25, 0
      %p243 = por %p241, %p242
      %p244 = scmp.ne.s32.totalorder %s233, %s236
      %p245 = scmp.eq.s32.totalorder %s30, 1
      %p246 = por %p244, %p245
      %p247 = scmp.ne.s32.totalorder %s236, %s237
      %p248 = scmp.eq.s32.totalorder %s30, 0
      %p249 = por %p247, %p248
      %p250 = scmp.ne.s32.totalorder %s236, %s237
      %p251 = scmp.eq.s32.totalorder %s31, 1
      %p252 = por %p250, %p251
      %p254 = scmp.ne.s32.totalorder %s237, %s253
      %p255 = scmp.eq.s32.totalorder %s31, 0
      %p256 = por %p254, %p255
      %s257 = ssub.s32 %s25, %s32
      %p258 = scmp.eq.s32.totalorder %s257, 0
      %s260 = sadd.s32 %s259, 1
      %s261 = scalar_select %p258, %s259, %s260
      %p264 = pneg %p258
      %p265 = scmp.eq.s32.totalorder %s25, 1
      %p266 = por %p264, %p265
      %p267 = scmp.ne.s32.totalorder %s259, %s262
      %p268 = scmp.eq.s32.totalorder %s25, 0
      %p269 = por %p267, %p268
      %p270 = scmp.ne.s32.totalorder %s259, %s262
      %p271 = scmp.eq.s32.totalorder %s30, 1
      %p272 = por %p270, %p271
      %p273 = scmp.ne.s32.totalorder %s262, %s263
      %p274 = scmp.eq.s32.totalorder %s30, 0
      %p275 = por %p273, %p274
      %p276 = scmp.ne.s32.totalorder %s262, %s263
      %p277 = scmp.eq.s32.totalorder %s31, 1
      %p278 = por %p276, %p277
      %p280 = scmp.ne.s32.totalorder %s263, %s279
      %p281 = scmp.eq.s32.totalorder %s31, 0
      %p282 = por %p280, %p281
      %p283 = scmp.le.s32.totalorder 1, %s25
      %p284 = scmp.lt.s32.totalorder %s25, 3
      %p285 = pnand %p283, %p284
      %p286 = pneg %p285
      // Predicated region
      $region9: #{tpu_custom_call.1} parent=5 // pred_check
        _
      $region10: #{tpu_custom_call.1} parent=5 // pred_check_branch
        %288 = sbr.rel (%p285) target = $region12
      $region11: #{tpu_custom_call.1} parent=5 // pred_region
        %s289 = ssub.s32 %s25, 1
        // Predicated region
        $region13: #{tpu_custom_call.1} parent=11 // pred_check
          %p290 = pneg %p150
        $region14: #{tpu_custom_call.1} parent=11 // pred_check_branch
          %292 = sbr.rel (%p290) target = $region16
        $region15: #{tpu_custom_call.1} parent=11 // pred_region
          _
        $region16: #{tpu_custom_call.1} parent=11 // pred_fallthru
          _
        // Predicated region
        $region17: #{tpu_custom_call.1} parent=11 // pred_check
          %p293 = pneg %p171
        $region18: #{tpu_custom_call.1} parent=11 // pred_check_branch
          %295 = sbr.rel (%p293) target = $region20
        $region19: #{tpu_custom_call.1} parent=11 // pred_region
          _
        $region20: #{tpu_custom_call.1} parent=11 // pred_fallthru
          _
      $region12: #{tpu_custom_call.1} parent=5 // pred_fallthru
        _
      %p296 = scmp.lt.s32.totalorder %s25, 2
      // Predicated region
      $region21: #{tpu_custom_call.1} parent=5 // pred_check
        %p297 = pneg %p296
      $region22: #{tpu_custom_call.1} parent=5 // pred_check_branch
        %299 = sbr.rel (%p297) target = $region24
      $region23: #{tpu_custom_call.1} parent=5 // pred_region
        // Predicated region
        $region25: #{tpu_custom_call.1} parent=23 // pred_check
          %p300 = pneg %p45
        $region26: #{tpu_custom_call.1} parent=23 // pred_check_branch
          %302 = sbr.rel (%p300) target = $region28
        $region27: #{tpu_custom_call.1} parent=23 // pred_region
          %p303 = scmp.lt.s32.totalorder %s25, 1
          %s304 = scalar_select %p303, %s25, 1
          %s305 = smul.addr %s304, 18
          %s306 = smul.addr %s305, 4
          %s307 = scalar_lea.vmem %s0, %s306
        $region28: #{tpu_custom_call.1} parent=23 // pred_fallthru
          _
        // Predicated region
        $region29: #{tpu_custom_call.1} parent=23 // pred_check
          %p308 = pneg %p71
        $region30: #{tpu_custom_call.1} parent=23 // pred_check_branch
          %310 = sbr.rel (%p308) target = $region32
        $region31: #{tpu_custom_call.1} parent=23 // pred_region
          %p311 = scmp.lt.s32.totalorder %s25, 1
          %s312 = scalar_select %p311, %s25, 1
          %s313 = smul.addr %s312, 18
          %s314 = smul.addr %s313, 4
          %s315 = scalar_lea.vmem %s1, %s314
        $region32: #{tpu_custom_call.1} parent=23 // pred_fallthru
          _
        // Predicated region
        $region33: #{tpu_custom_call.1} parent=23 // pred_check
          %p316 = pneg %p97
        $region34: #{tpu_custom_call.1} parent=23 // pred_check_branch
          %318 = sbr.rel (%p316) target = $region36
        $region35: #{tpu_custom_call.1} parent=23 // pred_region
          %p319 = scmp.lt.s32.totalorder %s25, 1
          %s320 = scalar_select %p319, %s25, 1
          %s321 = smul.addr %s320, 18
          %s322 = smul.addr %s321, 4
          %s323 = scalar_lea.vmem %s2, %s322
        $region36: #{tpu_custom_call.1} parent=23 // pred_fallthru
          _
        // Predicated region
        $region37: #{tpu_custom_call.1} parent=23 // pred_check
          %p324 = pneg %p123
        $region38: #{tpu_custom_call.1} parent=23 // pred_check_branch
          %326 = sbr.rel (%p324) target = $region40
        $region39: #{tpu_custom_call.1} parent=23 // pred_region
          %p327 = scmp.lt.s32.totalorder %s25, 1
          %s328 = scalar_select %p327, %s25, 1
          %s329 = smul.addr %s328, 18
          %s330 = smul.addr %s329, 4
          %s331 = scalar_lea.vmem %s3, %s330
        $region40: #{tpu_custom_call.1} parent=23 // pred_fallthru
          _
      $region24: #{tpu_custom_call.1} parent=5 // pred_fallthru
        _
      %p332 = scmp.le.s32.totalorder 1, %s25
      %p333 = scmp.lt.s32.totalorder %s25, 3
      %p334 = pnand %p332, %p333
      %p335 = pneg %p334
      // Predicated region
      $region41: #{tpu_custom_call.1} parent=5 // pred_check
        _
      $region42: #{tpu_custom_call.1} parent=5 // pred_check_branch
        %337 = sbr.rel (%p334) target = $region44
      $region43: #{tpu_custom_call.1} parent=5 // pred_region
        %s338 = ssub.s32 %s25, 1
        %p339 = scmp.lt.s32.totalorder %s30, 1
        %s340 = scalar_select %p339, %s30, 1
        %s341 = smul.addr %s340, 18
        %s342 = smul.addr %s341, 4
        %s343 = scalar_lea.vmem %s0, %s342
        %p344 = pneg %p51
        %p345 = pneg %p48
        %p346 = scmp.lt.s32.totalorder %s30, 1
        %s347 = scalar_select %p346, %s30, 1
        %s348 = smul.addr %s347, 18
        %s349 = smul.addr %s348, 4
        %s350 = scalar_lea.vmem %s1, %s349
        %p351 = pneg %p77
        %p352 = pneg %p74
        %p353 = scmp.lt.s32.totalorder %s30, 1
        %s354 = scalar_select %p353, %s30, 1
        %s355 = smul.addr %s354, 18
        %s356 = smul.addr %s355, 4
        %s357 = scalar_lea.vmem %s2, %s356
        %p358 = pneg %p103
        %p359 = pneg %p100
        %p360 = scmp.lt.s32.totalorder %s30, 1
        %s361 = scalar_select %p360, %s30, 1
        %s362 = smul.addr %s361, 18
        %s363 = smul.addr %s362, 4
        %s364 = scalar_lea.vmem %s3, %s363
        %p365 = pneg %p129
        %p366 = pneg %p126
        %p367 = pneg %p150
        %p368 = pneg %p147
        %p369 = pneg %p171
        %p370 = pneg %p168
        %p371 = pneg %p197
        %p372 = pneg %p194
        %s373 = sand.u32 %s184, 1
        %s374 = scalar_lea.sflag [#allocation4], %s373
        %s375 = sand.u32 %s184, 1
        %s376 = smul.addr %s375, 64
        %s377 = scalar_lea.vmem [#allocation3], %s376
        %p378 = pneg %p223
        %p379 = pneg %p220
        %s380 = sand.u32 %s30, 1
        %s381 = scalar_lea.sflag [#allocation6], %s380
        %s382 = sand.u32 %s210, 1
        %s383 = smul.addr %s382, 2
        %s384 = scalar_lea.vmem [#allocation5], %s383
        %p385 = pneg %p249
        %p386 = pneg %p246
        %s387 = sand.u32 %s30, 1
        %s388 = scalar_lea.sflag [#allocation6], %s387
        %s389 = sand.u32 %s236, 1
        %s390 = smul.addr %s389, 64
        %s391 = scalar_lea.vmem [#allocation7], %s390
        %p392 = pneg %p275
        %p393 = pneg %p272
        %s394 = sand.u32 %s262, 1
        %s395 = scalar_lea.sflag [#allocation9], %s394
        %s396 = sand.u32 %s262, 1
        %s397 = smul.addr %s396, 2
        %s398 = scalar_lea.vmem [#allocation8], %s397
        %p399 = scmp.lt.s32.totalorder %s30, 1
        %s400 = scalar_select %p399, %s30, 1
        %s401 = smul.addr %s400, 18
        %s402 = smul.addr %s401, 4
        %s403 = scalar_lea.vmem %s0, %s402
        %p404 = scmp.lt.s32.totalorder %s30, 1
        %s405 = scalar_select %p404, %s30, 1
        %s406 = smul.addr %s405, 18
        %s407 = smul.addr %s406, 4
        %s408 = scalar_lea.vmem %s1, %s407
        %p409 = scmp.lt.s32.totalorder %s30, 1
        %s410 = scalar_select %p409, %s30, 1
        %s411 = smul.addr %s410, 18
        %s412 = smul.addr %s411, 4
        %s413 = scalar_lea.vmem %s2, %s412
        %p414 = scmp.lt.s32.totalorder %s30, 1
        %s415 = scalar_select %p414, %s30, 1
        %s416 = smul.addr %s415, 18
        %s417 = smul.addr %s416, 4
        %s418 = scalar_lea.vmem %s3, %s417
        %s419 = smul.u32 8, %s30
        %s420 = smul.u32 8, %s30
        %v422 = vld [vmem:[%s403] sm:$0xf]
        %v423 = vld [vmem:[%s403 + $0x8] sm:$0xf]
        %v424 = vld [vmem:[%s403 + $0x10] sm:$0xf]
        %v425 = vld [vmem:[%s403 + $0x18] sm:$0xf]
        %v426 = vld [vmem:[%s403 + $0x20] sm:$0xf]
        %v427 = vld [vmem:[%s403 + $0x28] sm:$0xf]
        %v428 = vld [vmem:[%s403 + $0x30] sm:$0xf]
        %v429 = vld [vmem:[%s403 + $0x38] sm:$0xf]
        %v438 = vunpack.c.l.b16 %v422
        %v439 = vunpack.c.l.b16 %v423
        %v440 = vunpack.c.l.b16 %v424
        %v441 = vunpack.c.l.b16 %v425
        %v442 = vunpack.c.l.b16 %v426
        %v443 = vunpack.c.l.b16 %v427
        %v444 = vunpack.c.l.b16 %v428
        %v445 = vunpack.c.l.b16 %v429
        %v446 = vpack.c.b16 %v439, %v438
        %v447 = vpack.c.b16 %v441, %v440
        %v448 = vpack.c.b16 %v443, %v442
        %v449 = vpack.c.b16 %v445, %v444
        %454 = vst [vmem:[#allocation2] sm:$0xff] %v446
        %455 = vst [vmem:[#allocation2 + $0x48] sm:$0xff] %v447
        %456 = vst [vmem:[#allocation2 + $0x90] sm:$0xff] %v448
        %457 = vst [vmem:[#allocation2 + $0xd8] sm:$0xff] %v449
        %v458 = vld [vmem:[%s408] sm:$0xf]
        %v459 = vld [vmem:[%s408 + $0x8] sm:$0xf]
        %v460 = vld [vmem:[%s408 + $0x10] sm:$0xf]
        %v461 = vld [vmem:[%s408 + $0x18] sm:$0xf]
        %v462 = vld [vmem:[%s408 + $0x20] sm:$0xf]
        %v463 = vld [vmem:[%s408 + $0x28] sm:$0xf]
        %v464 = vld [vmem:[%s408 + $0x30] sm:$0xf]
        %v465 = vld [vmem:[%s408 + $0x38] sm:$0xf]
        %v474 = vunpack.c.l.b16 %v458
        %v475 = vunpack.c.l.b16 %v459
        %v476 = vunpack.c.l.b16 %v460
        %v477 = vunpack.c.l.b16 %v461
        %v478 = vunpack.c.l.b16 %v462
        %v479 = vunpack.c.l.b16 %v463
        %v480 = vunpack.c.l.b16 %v464
        %v481 = vunpack.c.l.b16 %v465
        %v482 = vpack.c.b16 %v475, %v474
        %v483 = vpack.c.b16 %v477, %v476
        %v484 = vpack.c.b16 %v479, %v478
        %v485 = vpack.c.b16 %v481, %v480
        %490 = vst [vmem:[#allocation2 + $0x8] sm:$0xff] %v482
        %491 = vst [vmem:[#allocation2 + $0x50] sm:$0xff] %v483
        %492 = vst [vmem:[#allocation2 + $0x98] sm:$0xff] %v484
        %493 = vst [vmem:[#allocation2 + $0xe0] sm:$0xff] %v485
        %v494 = vld [vmem:[%s403] sm:$0xf]
        %v495 = vld [vmem:[%s403 + $0x4] sm:$0x1]
        %v496 = vld [vmem:[%s403 + $0x8] sm:$0xf]
        %v497 = vld [vmem:[%s403 + $0xc] sm:$0x1]
        %v498 = vld [vmem:[%s403 + $0x10] sm:$0xf]
        %v499 = vld [vmem:[%s403 + $0x14] sm:$0x1]
        %v500 = vld [vmem:[%s403 + $0x18] sm:$0xf]
        %v501 = vld [vmem:[%s403 + $0x1c] sm:$0x1]
        %v502 = vld [vmem:[%s403 + $0x20] sm:$0xf]
        %v503 = vld [vmem:[%s403 + $0x24] sm:$0x1]
        %v504 = vld [vmem:[%s403 + $0x28] sm:$0xf]
        %v505 = vld [vmem:[%s403 + $0x2c] sm:$0x1]
        %v506 = vld [vmem:[%s403 + $0x30] sm:$0xf]
        %v507 = vld [vmem:[%s403 + $0x34] sm:$0x1]
        %v508 = vld [vmem:[%s403 + $0x38] sm:$0xf]
        %v509 = vld [vmem:[%s403 + $0x3c] sm:$0x1]
        %vm510 = vsmask.f32 3328
        %vm511 = vsmask.f32 7440
        %vm512 = vmor %vm510, %vm511
        %v514 = vshrl.u32 %v494, 16
        %v516 = vrot.slane %v514, 4
        %v517 = vshll.u32 %v494, 16
        %v519 = vrot.slane %v517, 5
        %v520 = vor.u32 %v516, %v519
        %v521 = vrot.slane %v520, 4
        %v523 = vshll.u32 %v495, 16
        %v525 = vrot.slane %v523, 5
        %v526 = vsel %vm512, %v521, %v525
        %v528 = vshrl.u32 %v496, 16
        %v530 = vrot.slane %v528, 4
        %v531 = vshll.u32 %v496, 16
        %v533 = vrot.slane %v531, 5
        %v534 = vor.u32 %v530, %v533
        %v535 = vrot.slane %v534, 4
        %v537 = vshll.u32 %v497, 16
        %v539 = vrot.slane %v537, 5
        %v540 = vsel %vm512, %v535, %v539
        %v542 = vshrl.u32 %v498, 16
        %v544 = vrot.slane %v542, 4
        %v545 = vshll.u32 %v498, 16
        %v547 = vrot.slane %v545, 5
        %v548 = vor.u32 %v544, %v547
        %v549 = vrot.slane %v548, 4
        %v551 = vshll.u32 %v499, 16
        %v553 = vrot.slane %v551, 5
        %v554 = vsel %vm512, %v549, %v553
        %v556 = vshrl.u32 %v500, 16
        %v558 = vrot.slane %v556, 4
        %v559 = vshll.u32 %v500, 16
        %v561 = vrot.slane %v559, 5
        %v562 = vor.u32 %v558, %v561
        %v563 = vrot.slane %v562, 4
        %v565 = vshll.u32 %v501, 16
        %v567 = vrot.slane %v565, 5
        %v568 = vsel %vm512, %v563, %v567
        %v570 = vshrl.u32 %v502, 16
        %v572 = vrot.slane %v570, 4
        %v573 = vshll.u32 %v502, 16
        %v575 = vrot.slane %v573, 5
        %v576 = vor.u32 %v572, %v575
        %v577 = vrot.slane %v576, 4
        %v579 = vshll.u32 %v503, 16
        %v581 = vrot.slane %v579, 5
        %v582 = vsel %vm512, %v577, %v581
        %v584 = vshrl.u32 %v504, 16
        %v586 = vrot.slane %v584, 4
        %v587 = vshll.u32 %v504, 16
        %v589 = vrot.slane %v587, 5
        %v590 = vor.u32 %v586, %v589
        %v591 = vrot.slane %v590, 4
        %v593 = vshll.u32 %v505, 16
        %v595 = vrot.slane %v593, 5
        %v596 = vsel %vm512, %v591, %v595
        %v598 = vshrl.u32 %v506, 16
        %v600 = vrot.slane %v598, 4
        %v601 = vshll.u32 %v506, 16
        %v603 = vrot.slane %v601, 5
        %v604 = vor.u32 %v600, %v603
        %v605 = vrot.slane %v604, 4
        %v607 = vshll.u32 %v507, 16
        %v609 = vrot.slane %v607, 5
        %v610 = vsel %vm512, %v605, %v609
        %v612 = vshrl.u32 %v508, 16
        %v614 = vrot.slane %v612, 4
        %v615 = vshll.u32 %v508, 16
        %v617 = vrot.slane %v615, 5
        %v618 = vor.u32 %v614, %v617
        %v619 = vrot.slane %v618, 4
        %v621 = vshll.u32 %v509, 16
        %v623 = vrot.slane %v621, 5
        %v624 = vsel %vm512, %v619, %v623
        %v625 = vunpack.c.l.b16 %v526
        %v626 = vunpack.c.l.b16 %v540
        %v627 = vunpack.c.l.b16 %v554
        %v628 = vunpack.c.l.b16 %v568
        %v629 = vunpack.c.l.b16 %v582
        %v630 = vunpack.c.l.b16 %v596
        %v631 = vunpack.c.l.b16 %v610
        %v632 = vunpack.c.l.b16 %v624
        %v633 = vpack.c.b16 %v626, %v625
        %v634 = vpack.c.b16 %v628, %v627
        %v635 = vpack.c.b16 %v630, %v629
        %v636 = vpack.c.b16 %v632, %v631
        %641 = vst [vmem:[#allocation2 + $0x10] sm:$0xff] %v633
        %642 = vst [vmem:[#allocation2 + $0x58] sm:$0xff] %v634
        %643 = vst [vmem:[#allocation2 + $0xa0] sm:$0xff] %v635
        %644 = vst [vmem:[#allocation2 + $0xe8] sm:$0xff] %v636
        %v645 = vld [vmem:[%s413] sm:$0xf]
        %v646 = vld [vmem:[%s413 + $0x8] sm:$0xf]
        %v647 = vld [vmem:[%s413 + $0x10] sm:$0xf]
        %v648 = vld [vmem:[%s413 + $0x18] sm:$0xf]
        %v649 = vld [vmem:[%s413 + $0x20] sm:$0xf]
        %v650 = vld [vmem:[%s413 + $0x28] sm:$0xf]
        %v651 = vld [vmem:[%s413 + $0x30] sm:$0xf]
        %v652 = vld [vmem:[%s413 + $0x38] sm:$0xf]
        %v661 = vunpack.c.l.b16 %v645
        %v662 = vunpack.c.l.b16 %v646
        %v663 = vunpack.c.l.b16 %v647
        %v664 = vunpack.c.l.b16 %v648
        %v665 = vunpack.c.l.b16 %v649
        %v666 = vunpack.c.l.b16 %v650
        %v667 = vunpack.c.l.b16 %v651
        %v668 = vunpack.c.l.b16 %v652
        %v669 = vpack.c.b16 %v662, %v661
        %v670 = vpack.c.b16 %v664, %v663
        %v671 = vpack.c.b16 %v666, %v665
        %v672 = vpack.c.b16 %v668, %v667
        %677 = vst [vmem:[#allocation2 + $0x18] sm:$0xff] %v669
        %678 = vst [vmem:[#allocation2 + $0x60] sm:$0xff] %v670
        %679 = vst [vmem:[#allocation2 + $0xa8] sm:$0xff] %v671
        %680 = vst [vmem:[#allocation2 + $0xf0] sm:$0xff] %v672
        %v681 = vld [vmem:[%s418] sm:$0xf]
        %v682 = vld [vmem:[%s418 + $0x8] sm:$0xf]
        %v683 = vld [vmem:[%s418 + $0x10] sm:$0xf]
        %v684 = vld [vmem:[%s418 + $0x18] sm:$0xf]
        %v685 = vld [vmem:[%s418 + $0x20] sm:$0xf]
        %v686 = vld [vmem:[%s418 + $0x28] sm:$0xf]
        %v687 = vld [vmem:[%s418 + $0x30] sm:$0xf]
        %v688 = vld [vmem:[%s418 + $0x38] sm:$0xf]
        %v697 = vunpack.c.l.b16 %v681
        %v698 = vunpack.c.l.b16 %v682
        %v699 = vunpack.c.l.b16 %v683
        %v700 = vunpack.c.l.b16 %v684
        %v701 = vunpack.c.l.b16 %v685
        %v702 = vunpack.c.l.b16 %v686
        %v703 = vunpack.c.l.b16 %v687
        %v704 = vunpack.c.l.b16 %v688
        %v705 = vpack.c.b16 %v698, %v697
        %v706 = vpack.c.b16 %v700, %v699
        %v707 = vpack.c.b16 %v702, %v701
        %v708 = vpack.c.b16 %v704, %v703
        %713 = vst [vmem:[#allocation2 + $0x20] sm:$0xff] %v705
        %714 = vst [vmem:[#allocation2 + $0x68] sm:$0xff] %v706
        %715 = vst [vmem:[#allocation2 + $0xb0] sm:$0xff] %v707
        %716 = vst [vmem:[#allocation2 + $0xf8] sm:$0xff] %v708
        %v717 = vld [vmem:[%s413] sm:$0xf]
        %v718 = vld [vmem:[%s413 + $0x4] sm:$0x1]
        %v719 = vld [vmem:[%s413 + $0x8] sm:$0xf]
        %v720 = vld [vmem:[%s413 + $0xc] sm:$0x1]
        %v721 = vld [vmem:[%s413 + $0x10] sm:$0xf]
        %v722 = vld [vmem:[%s413 + $0x14] sm:$0x1]
        %v723 = vld [vmem:[%s413 + $0x18] sm:$0xf]
        %v724 = vld [vmem:[%s413 + $0x1c] sm:$0x1]
        %v725 = vld [vmem:[%s413 + $0x20] sm:$0xf]
        %v726 = vld [vmem:[%s413 + $0x24] sm:$0x1]
        %v727 = vld [vmem:[%s413 + $0x28] sm:$0xf]
        %v728 = vld [vmem:[%s413 + $0x2c] sm:$0x1]
        %v729 = vld [vmem:[%s413 + $0x30] sm:$0xf]
        %v730 = vld [vmem:[%s413 + $0x34] sm:$0x1]
        %v731 = vld [vmem:[%s413 + $0x38] sm:$0xf]
        %v732 = vld [vmem:[%s413 + $0x3c] sm:$0x1]
        %v734 = vshrl.u32 %v717, 16
        %v736 = vrot.slane %v734, 4
        %v737 = vshll.u32 %v717, 16
        %v739 = vrot.slane %v737, 5
        %v740 = vor.u32 %v736, %v739
        %v741 = vrot.slane %v740, 4
        %v743 = vshll.u32 %v718, 16
        %v745 = vrot.slane %v743, 5
        %v746 = vsel %vm512, %v741, %v745
        %v748 = vshrl.u32 %v719, 16
        %v750 = vrot.slane %v748, 4
        %v751 = vshll.u32 %v719, 16
        %v753 = vrot.slane %v751, 5
        %v754 = vor.u32 %v750, %v753
        %v755 = vrot.slane %v754, 4
        %v757 = vshll.u32 %v720, 16
        %v759 = vrot.slane %v757, 5
        %v760 = vsel %vm512, %v755, %v759
        %v762 = vshrl.u32 %v721, 16
        %v764 = vrot.slane %v762, 4
        %v765 = vshll.u32 %v721, 16
        %v767 = vrot.slane %v765, 5
        %v768 = vor.u32 %v764, %v767
        %v769 = vrot.slane %v768, 4
        %v771 = vshll.u32 %v722, 16
        %v773 = vrot.slane %v771, 5
        %v774 = vsel %vm512, %v769, %v773
        %v776 = vshrl.u32 %v723, 16
        %v778 = vrot.slane %v776, 4
        %v779 = vshll.u32 %v723, 16
        %v781 = vrot.slane %v779, 5
        %v782 = vor.u32 %v778, %v781
        %v783 = vrot.slane %v782, 4
        %v785 = vshll.u32 %v724, 16
        %v787 = vrot.slane %v785, 5
        %v788 = vsel %vm512, %v783, %v787
        %v790 = vshrl.u32 %v725, 16
        %v792 = vrot.slane %v790, 4
        %v793 = vshll.u32 %v725, 16
        %v795 = vrot.slane %v793, 5
        %v796 = vor.u32 %v792, %v795
        %v797 = vrot.slane %v796, 4
        %v799 = vshll.u32 %v726, 16
        %v801 = vrot.slane %v799, 5
        %v802 = vsel %vm512, %v797, %v801
        %v804 = vshrl.u32 %v727, 16
        %v806 = vrot.slane %v804, 4
        %v807 = vshll.u32 %v727, 16
        %v809 = vrot.slane %v807, 5
        %v810 = vor.u32 %v806, %v809
        %v811 = vrot.slane %v810, 4
        %v813 = vshll.u32 %v728, 16
        %v815 = vrot.slane %v813, 5
        %v816 = vsel %vm512, %v811, %v815
        %v818 = vshrl.u32 %v729, 16
        %v820 = vrot.slane %v818, 4
        %v821 = vshll.u32 %v729, 16
        %v823 = vrot.slane %v821, 5
        %v824 = vor.u32 %v820, %v823
        %v825 = vrot.slane %v824, 4
        %v827 = vshll.u32 %v730, 16
        %v829 = vrot.slane %v827, 5
        %v830 = vsel %vm512, %v825, %v829
        %v832 = vshrl.u32 %v731, 16
        %v834 = vrot.slane %v832, 4
        %v835 = vshll.u32 %v731, 16
        %v837 = vrot.slane %v835, 5
        %v838 = vor.u32 %v834, %v837
        %v839 = vrot.slane %v838, 4
        %v841 = vshll.u32 %v732, 16
        %v843 = vrot.slane %v841, 5
        %v844 = vsel %vm512, %v839, %v843
        %v845 = vunpack.c.l.b16 %v746
        %v846 = vunpack.c.l.b16 %v760
        %v847 = vunpack.c.l.b16 %v774
        %v848 = vunpack.c.l.b16 %v788
        %v849 = vunpack.c.l.b16 %v802
        %v850 = vunpack.c.l.b16 %v816
        %v851 = vunpack.c.l.b16 %v830
        %v852 = vunpack.c.l.b16 %v844
        %v853 = vpack.c.b16 %v846, %v845
        %v854 = vpack.c.b16 %v848, %v847
        %v855 = vpack.c.b16 %v850, %v849
        %v856 = vpack.c.b16 %v852, %v851
        %861 = vst [vmem:[#allocation2 + $0x28] sm:$0xff] %v853
        %862 = vst [vmem:[#allocation2 + $0x70] sm:$0xff] %v854
        %863 = vst [vmem:[#allocation2 + $0xb8] sm:$0xff] %v855
        %864 = vst [vmem:[#allocation2 + $0x100] sm:$0xff] %v856
        %s865 = scalar_lea.vmem %s403, 8
        %v866 = vld [vmem:[%s865] sm:$0xf]
        %v867 = vld [vmem:[%s865 + $0x8] sm:$0xf]
        %v868 = vld [vmem:[%s865 + $0x10] sm:$0xf]
        %v869 = vld [vmem:[%s865 + $0x18] sm:$0xf]
        %v870 = vld [vmem:[%s865 + $0x20] sm:$0xf]
        %v871 = vld [vmem:[%s865 + $0x28] sm:$0xf]
        %v872 = vld [vmem:[%s865 + $0x30] sm:$0xf]
        %v873 = vld [vmem:[%s865 + $0x38] sm:$0xf]
        %v882 = vunpack.c.l.b16 %v866
        %v883 = vunpack.c.l.b16 %v867
        %v884 = vunpack.c.l.b16 %v868
        %v885 = vunpack.c.l.b16 %v869
        %v886 = vunpack.c.l.b16 %v870
        %v887 = vunpack.c.l.b16 %v871
        %v888 = vunpack.c.l.b16 %v872
        %v889 = vunpack.c.l.b16 %v873
        %v890 = vpack.c.b16 %v883, %v882
        %v891 = vpack.c.b16 %v885, %v884
        %v892 = vpack.c.b16 %v887, %v886
        %v893 = vpack.c.b16 %v889, %v888
        %898 = vst [vmem:[#allocation2 + $0x30] sm:$0xff] %v890
        %899 = vst [vmem:[#allocation2 + $0x78] sm:$0xff] %v891
        %900 = vst [vmem:[#allocation2 + $0xc0] sm:$0xff] %v892
        %901 = vst [vmem:[#allocation2 + $0x108] sm:$0xff] %v893
        %s902 = scalar_lea.vmem %s408, 8
        %v903 = vld [vmem:[%s902] sm:$0xf]
        %v904 = vld [vmem:[%s902 + $0x8] sm:$0xf]
        %v905 = vld [vmem:[%s902 + $0x10] sm:$0xf]
        %v906 = vld [vmem:[%s902 + $0x18] sm:$0xf]
        %v907 = vld [vmem:[%s902 + $0x20] sm:$0xf]
        %v908 = vld [vmem:[%s902 + $0x28] sm:$0xf]
        %v909 = vld [vmem:[%s902 + $0x30] sm:$0xf]
        %v910 = vld [vmem:[%s902 + $0x38] sm:$0xf]
        %v919 = vunpack.c.l.b16 %v903
        %v920 = vunpack.c.l.b16 %v904
        %v921 = vunpack.c.l.b16 %v905
        %v922 = vunpack.c.l.b16 %v906
        %v923 = vunpack.c.l.b16 %v907
        %v924 = vunpack.c.l.b16 %v908
        %v925 = vunpack.c.l.b16 %v909
        %v926 = vunpack.c.l.b16 %v910
        %v927 = vpack.c.b16 %v920, %v919
        %v928 = vpack.c.b16 %v922, %v921
        %v929 = vpack.c.b16 %v924, %v923
        %v930 = vpack.c.b16 %v926, %v925
        %935 = vst [vmem:[#allocation2 + $0x38] sm:$0xff] %v927
        %936 = vst [vmem:[#allocation2 + $0x80] sm:$0xff] %v928
        %937 = vst [vmem:[#allocation2 + $0xc8] sm:$0xff] %v929
        %938 = vst [vmem:[#allocation2 + $0x110] sm:$0xff] %v930
        %v939 = vld [vmem:[%s865] sm:$0xf]
        %v940 = vld [vmem:[%s865 + $0x4] sm:$0x1]
        %v941 = vld [vmem:[%s865 + $0x8] sm:$0xf]
        %v942 = vld [vmem:[%s865 + $0xc] sm:$0x1]
        %v943 = vld [vmem:[%s865 + $0x10] sm:$0xf]
        %v944 = vld [vmem:[%s865 + $0x14] sm:$0x1]
        %v945 = vld [vmem:[%s865 + $0x18] sm:$0xf]
        %v946 = vld [vmem:[%s865 + $0x1c] sm:$0x1]
        %v947 = vld [vmem:[%s865 + $0x20] sm:$0xf]
        %v948 = vld [vmem:[%s865 + $0x24] sm:$0x1]
        %v949 = vld [vmem:[%s865 + $0x28] sm:$0xf]
        %v950 = vld [vmem:[%s865 + $0x2c] sm:$0x1]
        %v951 = vld [vmem:[%s865 + $0x30] sm:$0xf]
        %v952 = vld [vmem:[%s865 + $0x34] sm:$0x1]
        %v953 = vld [vmem:[%s865 + $0x38] sm:$0xf]
        %v954 = vld [vmem:[%s865 + $0x3c] sm:$0x1]
        %v956 = vshrl.u32 %v939, 16
        %v958 = vrot.slane %v956, 4
        %v959 = vshll.u32 %v939, 16
        %v961 = vrot.slane %v959, 5
        %v962 = vor.u32 %v958, %v961
        %v963 = vrot.slane %v962, 4
        %v965 = vshll.u32 %v940, 16
        %v967 = vrot.slane %v965, 5
        %v968 = vsel %vm512, %v963, %v967
        %v970 = vshrl.u32 %v941, 16
        %v972 = vrot.slane %v970, 4
        %v973 = vshll.u32 %v941, 16
        %v975 = vrot.slane %v973, 5
        %v976 = vor.u32 %v972, %v975
        %v977 = vrot.slane %v976, 4
        %v979 = vshll.u32 %v942, 16
        %v981 = vrot.slane %v979, 5
        %v982 = vsel %vm512, %v977, %v981
        %v984 = vshrl.u32 %v943, 16
        %v986 = vrot.slane %v984, 4
        %v987 = vshll.u32 %v943, 16
        %v989 = vrot.slane %v987, 5
        %v990 = vor.u32 %v986, %v989
        %v991 = vrot.slane %v990, 4
        %v993 = vshll.u32 %v944, 16
        %v995 = vrot.slane %v993, 5
        %v996 = vsel %vm512, %v991, %v995
        %v998 = vshrl.u32 %v945, 16
        %v1000 = vrot.slane %v998, 4
        %v1001 = vshll.u32 %v945, 16
        %v1003 = vrot.slane %v1001, 5
        %v1004 = vor.u32 %v1000, %v1003
        %v1005 = vrot.slane %v1004, 4
        %v1007 = vshll.u32 %v946, 16
        %v1009 = vrot.slane %v1007, 5
        %v1010 = vsel %vm512, %v1005, %v1009
        %v1012 = vshrl.u32 %v947, 16
        %v1014 = vrot.slane %v1012, 4
        %v1015 = vshll.u32 %v947, 16
        %v1017 = vrot.slane %v1015, 5
        %v1018 = vor.u32 %v1014, %v1017
        %v1019 = vrot.slane %v1018, 4
        %v1021 = vshll.u32 %v948, 16
        %v1023 = vrot.slane %v1021, 5
        %v1024 = vsel %vm512, %v1019, %v1023
        %v1026 = vshrl.u32 %v949, 16
        %v1028 = vrot.slane %v1026, 4
        %v1029 = vshll.u32 %v949, 16
        %v1031 = vrot.slane %v1029, 5
        %v1032 = vor.u32 %v1028, %v1031
        %v1033 = vrot.slane %v1032, 4
        %v1035 = vshll.u32 %v950, 16
        %v1037 = vrot.slane %v1035, 5
        %v1038 = vsel %vm512, %v1033, %v1037
        %v1040 = vshrl.u32 %v951, 16
        %v1042 = vrot.slane %v1040, 4
        %v1043 = vshll.u32 %v951, 16
        %v1045 = vrot.slane %v1043, 5
        %v1046 = vor.u32 %v1042, %v1045
        %v1047 = vrot.slane %v1046, 4
        %v1049 = vshll.u32 %v952, 16
        %v1051 = vrot.slane %v1049, 5
        %v1052 = vsel %vm512, %v1047, %v1051
        %v1054 = vshrl.u32 %v953, 16
        %v1056 = vrot.slane %v1054, 4
        %v1057 = vshll.u32 %v953, 16
        %v1059 = vrot.slane %v1057, 5
        %v1060 = vor.u32 %v1056, %v1059
        %v1061 = vrot.slane %v1060, 4
        %v1063 = vshll.u32 %v954, 16
        %v1065 = vrot.slane %v1063, 5
        %v1066 = vsel %vm512, %v1061, %v1065
        %v1067 = vunpack.c.l.b16 %v968
        %v1068 = vunpack.c.l.b16 %v982
        %v1069 = vunpack.c.l.b16 %v996
        %v1070 = vunpack.c.l.b16 %v1010
        %v1071 = vunpack.c.l.b16 %v1024
        %v1072 = vunpack.c.l.b16 %v1038
        %v1073 = vunpack.c.l.b16 %v1052
        %v1074 = vunpack.c.l.b16 %v1066
        %v1075 = vpack.c.b16 %v1068, %v1067
        %v1076 = vpack.c.b16 %v1070, %v1069
        %v1077 = vpack.c.b16 %v1072, %v1071
        %v1078 = vpack.c.b16 %v1074, %v1073
        %1083 = vst [vmem:[#allocation2 + $0x40] sm:$0xff] %v1075
        %1084 = vst [vmem:[#allocation2 + $0x88] sm:$0xff] %v1076
        %1085 = vst [vmem:[#allocation2 + $0xd0] sm:$0xff] %v1077
        %1086 = vst [vmem:[#allocation2 + $0x118] sm:$0xff] %v1078
        %v1087 = vld [vmem:[#allocation2] sm:$0xff]
        %v1088 = vld [vmem:[#allocation2 + $0x8] sm:$0xff]
        %v1089 = vld [vmem:[#allocation2 + $0x10] sm:$0xff]
        %v1090 = vld [vmem:[#allocation2 + $0x18] sm:$0xff]
        %v1091 = vld [vmem:[#allocation2 + $0x20] sm:$0xff]
        %v1092 = vld [vmem:[#allocation2 + $0x28] sm:$0xff]
        %v1093 = vld [vmem:[#allocation2 + $0x30] sm:$0xff]
        %v1094 = vld [vmem:[#allocation2 + $0x38] sm:$0xff]
        %v1095 = vld [vmem:[#allocation2 + $0x40] sm:$0xff]
        %v1096 = vld [vmem:[#allocation2 + $0x48] sm:$0xff]
        %v1097 = vld [vmem:[#allocation2 + $0x50] sm:$0xff]
        %v1098 = vld [vmem:[#allocation2 + $0x58] sm:$0xff]
        %v1099 = vld [vmem:[#allocation2 + $0x60] sm:$0xff]
        %v1100 = vld [vmem:[#allocation2 + $0x68] sm:$0xff]
        %v1101 = vld [vmem:[#allocation2 + $0x70] sm:$0xff]
        %v1102 = vld [vmem:[#allocation2 + $0x78] sm:$0xff]
        %v1103 = vld [vmem:[#allocation2 + $0x80] sm:$0xff]
        %v1104 = vld [vmem:[#allocation2 + $0x88] sm:$0xff]
        %v1105 = vld [vmem:[#allocation2 + $0x90] sm:$0xff]
        %v1106 = vld [vmem:[#allocation2 + $0x98] sm:$0xff]
        %v1107 = vld [vmem:[#allocation2 + $0xa0] sm:$0xff]
        %v1108 = vld [vmem:[#allocation2 + $0xa8] sm:$0xff]
        %v1109 = vld [vmem:[#allocation2 + $0xb0] sm:$0xff]
        %v1110 = vld [vmem:[#allocation2 + $0xb8] sm:$0xff]
        %v1111 = vld [vmem:[#allocation2 + $0xc0] sm:$0xff]
        %v1112 = vld [vmem:[#allocation2 + $0xc8] sm:$0xff]
        %v1113 = vld [vmem:[#allocation2 + $0xd0] sm:$0xff]
        %v1114 = vld [vmem:[#allocation2 + $0xd8] sm:$0xff]
        %v1115 = vld [vmem:[#allocation2 + $0xe0] sm:$0xff]
        %v1116 = vld [vmem:[#allocation2 + $0xe8] sm:$0xff]
        %v1117 = vld [vmem:[#allocation2 + $0xf0] sm:$0xff]
        %v1118 = vld [vmem:[#allocation2 + $0xf8] sm:$0xff]
        %v1119 = vld [vmem:[#allocation2 + $0x100] sm:$0xff]
        %v1120 = vld [vmem:[#allocation2 + $0x108] sm:$0xff]
        %v1121 = vld [vmem:[#allocation2 + $0x110] sm:$0xff]
        %v1122 = vld [vmem:[#allocation2 + $0x118] sm:$0xff]
        %v1123 = vld [vmem:[%s4] sm:$0xf]
        %v1124 = vld [vmem:[%s4 + $0x4] sm:$0xf]
        %v1125 = vld [vmem:[%s4 + $0x8] sm:$0xf]
        %v1126 = vld [vmem:[%s4 + $0xc] sm:$0xf]
        %v1127 = vld [vmem:[%s4 + $0x10] sm:$0xf]
        %v1128 = vld [vmem:[%s4 + $0x14] sm:$0xf]
        %v1129 = vld [vmem:[%s4 + $0x18] sm:$0xf]
        %v1130 = vld [vmem:[%s4 + $0x1c] sm:$0xf]
        %v1131 = vld [vmem:[%s4 + $0x20] sm:$0xf]
        %v1132 = vld [vmem:[%s4 + $0x24] sm:$0xf]
        %v1133 = vld [vmem:[%s4 + $0x28] sm:$0xf]
        %v1134 = vld [vmem:[%s4 + $0x2c] sm:$0xf]
        %v1135 = vld [vmem:[%s4 + $0x30] sm:$0xf]
        %v1136 = vld [vmem:[%s4 + $0x34] sm:$0xf]
        %v1137 = vld [vmem:[%s4 + $0x38] sm:$0xf]
        %v1138 = vld [vmem:[%s4 + $0x3c] sm:$0xf]
        %v1139 = vld [vmem:[%s4 + $0x40] sm:$0xf]
        %v1140 = vld [vmem:[%s4 + $0x44] sm:$0xf]
        %v1141 = vld [vmem:[%s4 + $0x48] sm:$0xf]
        %v1142 = vld [vmem:[%s4 + $0x4c] sm:$0xf]
        %v1143 = vld [vmem:[%s4 + $0x50] sm:$0xf]
        %v1144 = vld [vmem:[%s4 + $0x54] sm:$0xf]
        %v1145 = vld [vmem:[%s4 + $0x58] sm:$0xf]
        %v1146 = vld [vmem:[%s4 + $0x5c] sm:$0xf]
        %v1147 = vld [vmem:[%s4 + $0x60] sm:$0xf]
        %v1148 = vld [vmem:[%s4 + $0x64] sm:$0xf]
        %v1149 = vld [vmem:[%s4 + $0x68] sm:$0xf]
        %v1150 = vld [vmem:[%s4 + $0x6c] sm:$0xf]
        %v1151 = vld [vmem:[%s4 + $0x70] sm:$0xf]
        %v1152 = vld [vmem:[%s4 + $0x74] sm:$0xf]
        %v1153 = vld [vmem:[%s4 + $0x78] sm:$0xf]
        %v1154 = vld [vmem:[%s4 + $0x7c] sm:$0xf]
        %v1155 = vld [vmem:[%s4 + $0x80] sm:$0xf]
        %v1156 = vld [vmem:[%s4 + $0x84] sm:$0xf]
        %v1157 = vld [vmem:[%s4 + $0x88] sm:$0xf]
        %v1158 = vld [vmem:[%s4 + $0x8c] sm:$0xf]
        %v1159 = vld [vmem:[%s4 + $0x90] sm:$0xf]
        %v1160 = vld [vmem:[%s4 + $0x94] sm:$0xf]
        %v1161 = vld [vmem:[%s4 + $0x98] sm:$0xf]
        %v1162 = vld [vmem:[%s4 + $0x9c] sm:$0xf]
        %v1163 = vld [vmem:[%s4 + $0xa0] sm:$0xf]
        %v1164 = vld [vmem:[%s4 + $0xa4] sm:$0xf]
        %v1165 = vld [vmem:[%s4 + $0xa8] sm:$0xf]
        %v1166 = vld [vmem:[%s4 + $0xac] sm:$0xf]
        %v1167 = vld [vmem:[%s4 + $0xb0] sm:$0xf]
        %v1168 = vld [vmem:[%s4 + $0xb4] sm:$0xf]
        %v1169 = vld [vmem:[%s4 + $0xb8] sm:$0xf]
        %v1170 = vld [vmem:[%s4 + $0xbc] sm:$0xf]
        %v1171 = vld [vmem:[%s4 + $0xc0] sm:$0xf]
        %v1172 = vld [vmem:[%s4 + $0xc4] sm:$0xf]
        %v1173 = vld [vmem:[%s4 + $0xc8] sm:$0xf]
        %v1174 = vld [vmem:[%s4 + $0xcc] sm:$0xf]
        %v1175 = vld [vmem:[%s4 + $0xd0] sm:$0xf]
        %v1176 = vld [vmem:[%s4 + $0xd4] sm:$0xf]
        %v1177 = vld [vmem:[%s4 + $0xd8] sm:$0xf]
        %v1178 = vld [vmem:[%s4 + $0xdc] sm:$0xf]
        %v1179 = vld [vmem:[%s4 + $0xe0] sm:$0xf]
        %v1180 = vld [vmem:[%s4 + $0xe4] sm:$0xf]
        %v1181 = vld [vmem:[%s4 + $0xe8] sm:$0xf]
        %v1182 = vld [vmem:[%s4 + $0xec] sm:$0xf]
        %v1183 = vld [vmem:[%s4 + $0xf0] sm:$0xf]
        %v1184 = vld [vmem:[%s4 + $0xf4] sm:$0xf]
        %v1185 = vld [vmem:[%s4 + $0xf8] sm:$0xf]
        %v1186 = vld [vmem:[%s4 + $0xfc] sm:$0xf]
        %v1187 = vld [vmem:[%s4 + $0x100] sm:$0xf]
        %v1188 = vld [vmem:[%s4 + $0x104] sm:$0xf]
        %v1189 = vld [vmem:[%s4 + $0x108] sm:$0xf]
        %v1190 = vld [vmem:[%s4 + $0x10c] sm:$0xf]
        %v1191 = vld [vmem:[%s4 + $0x110] sm:$0xf]
        %v1192 = vld [vmem:[%s4 + $0x114] sm:$0xf]
        %v1193 = vld [vmem:[%s4 + $0x118] sm:$0xf]
        %v1194 = vld [vmem:[%s4 + $0x11c] sm:$0xf]
        %v1195 = vld [vmem:[%s4 + $0x120] sm:$0xf]
        %v1196 = vld [vmem:[%s4 + $0x124] sm:$0xf]
        %v1197 = vld [vmem:[%s4 + $0x128] sm:$0xf]
        %v1198 = vld [vmem:[%s4 + $0x12c] sm:$0xf]
        %v1199 = vld [vmem:[%s4 + $0x130] sm:$0xf]
        %v1200 = vld [vmem:[%s4 + $0x134] sm:$0xf]
        %v1201 = vld [vmem:[%s4 + $0x138] sm:$0xf]
        %v1202 = vld [vmem:[%s4 + $0x13c] sm:$0xf]
        %v1203 = vld [vmem:[%s4 + $0x140] sm:$0xf]
        %v1204 = vld [vmem:[%s4 + $0x144] sm:$0xf]
        %v1205 = vld [vmem:[%s4 + $0x148] sm:$0xf]
        %v1206 = vld [vmem:[%s4 + $0x14c] sm:$0xf]
        %v1207 = vld [vmem:[%s4 + $0x150] sm:$0xf]
        %v1208 = vld [vmem:[%s4 + $0x154] sm:$0xf]
        %v1209 = vld [vmem:[%s4 + $0x158] sm:$0xf]
        %v1210 = vld [vmem:[%s4 + $0x15c] sm:$0xf]
        %v1211 = vld [vmem:[%s4 + $0x160] sm:$0xf]
        %v1212 = vld [vmem:[%s4 + $0x164] sm:$0xf]
        %v1213 = vld [vmem:[%s4 + $0x168] sm:$0xf]
        %v1214 = vld [vmem:[%s4 + $0x16c] sm:$0xf]
        %v1215 = vld [vmem:[%s4 + $0x170] sm:$0xf]
        %v1216 = vld [vmem:[%s4 + $0x174] sm:$0xf]
        %v1217 = vld [vmem:[%s4 + $0x178] sm:$0xf]
        %v1218 = vld [vmem:[%s4 + $0x17c] sm:$0xf]
        %v1219 = vld [vmem:[%s4 + $0x180] sm:$0xf]
        %v1220 = vld [vmem:[%s4 + $0x184] sm:$0xf]
        %v1221 = vld [vmem:[%s4 + $0x188] sm:$0xf]
        %v1222 = vld [vmem:[%s4 + $0x18c] sm:$0xf]
        %v1223 = vld [vmem:[%s4 + $0x190] sm:$0xf]
        %v1224 = vld [vmem:[%s4 + $0x194] sm:$0xf]
        %v1225 = vld [vmem:[%s4 + $0x198] sm:$0xf]
        %v1226 = vld [vmem:[%s4 + $0x19c] sm:$0xf]
        %v1227 = vld [vmem:[%s4 + $0x1a0] sm:$0xf]
        %v1228 = vld [vmem:[%s4 + $0x1a4] sm:$0xf]
        %v1229 = vld [vmem:[%s4 + $0x1a8] sm:$0xf]
        %v1230 = vld [vmem:[%s4 + $0x1ac] sm:$0xf]
        %v1231 = vld [vmem:[%s4 + $0x1b0] sm:$0xf]
        %v1232 = vld [vmem:[%s4 + $0x1b4] sm:$0xf]
        %v1233 = vld [vmem:[%s4 + $0x1b8] sm:$0xf]
        %v1234 = vld [vmem:[%s4 + $0x1bc] sm:$0xf]
        %v1235 = vld [vmem:[%s4 + $0x1c0] sm:$0xf]
        %v1236 = vld [vmem:[%s4 + $0x1c4] sm:$0xf]
        %v1237 = vld [vmem:[%s4 + $0x1c8] sm:$0xf]
        %v1238 = vld [vmem:[%s4 + $0x1cc] sm:$0xf]
        %v1239 = vld [vmem:[%s4 + $0x1d0] sm:$0xf]
        %v1240 = vld [vmem:[%s4 + $0x1d4] sm:$0xf]
        %v1241 = vld [vmem:[%s4 + $0x1d8] sm:$0xf]
        %v1242 = vld [vmem:[%s4 + $0x1dc] sm:$0xf]
        %v1243 = vld [vmem:[%s4 + $0x1e0] sm:$0xf]
        %v1244 = vld [vmem:[%s4 + $0x1e4] sm:$0xf]
        %v1245 = vld [vmem:[%s4 + $0x1e8] sm:$0xf]
        %v1246 = vld [vmem:[%s4 + $0x1ec] sm:$0xf]
        %v1247 = vld [vmem:[%s4 + $0x1f0] sm:$0xf]
        %v1248 = vld [vmem:[%s4 + $0x1f4] sm:$0xf]
        %v1249 = vld [vmem:[%s4 + $0x1f8] sm:$0xf]
        %v1250 = vld [vmem:[%s4 + $0x1fc] sm:$0xf]
        %v1251 = vld [vmem:[%s4 + $0x200] sm:$0xf]
        %v1252 = vld [vmem:[%s4 + $0x204] sm:$0xf]
        %v1253 = vld [vmem:[%s4 + $0x208] sm:$0xf]
        %v1254 = vld [vmem:[%s4 + $0x20c] sm:$0xf]
        %v1255 = vld [vmem:[%s4 + $0x210] sm:$0xf]
        %v1256 = vld [vmem:[%s4 + $0x214] sm:$0xf]
        %v1257 = vld [vmem:[%s4 + $0x218] sm:$0xf]
        %v1258 = vld [vmem:[%s4 + $0x21c] sm:$0xf]
        %v1259 = vld [vmem:[%s4 + $0x220] sm:$0xf]
        %v1260 = vld [vmem:[%s4 + $0x224] sm:$0xf]
        %v1261 = vld [vmem:[%s4 + $0x228] sm:$0xf]
        %v1262 = vld [vmem:[%s4 + $0x22c] sm:$0xf]
        %v1263 = vld [vmem:[%s4 + $0x230] sm:$0xf]
        %v1264 = vld [vmem:[%s4 + $0x234] sm:$0xf]
        %v1265 = vld [vmem:[%s4 + $0x238] sm:$0xf]
        %v1266 = vld [vmem:[%s4 + $0x23c] sm:$0xf]
        %v1411 = vunpack.c.l.b16 %v1123
        %v1412 = vunpack.c.l.b16 %v1124
        %v1413 = vunpack.c.l.b16 %v1125
        %v1414 = vunpack.c.l.b16 %v1126
        %v1415 = vunpack.c.l.b16 %v1127
        %v1416 = vunpack.c.l.b16 %v1128
        %v1417 = vunpack.c.l.b16 %v1129
        %v1418 = vunpack.c.l.b16 %v1130
        %v1419 = vunpack.c.l.b16 %v1131
        %v1420 = vunpack.c.l.b16 %v1132
        %v1421 = vunpack.c.l.b16 %v1133
        %v1422 = vunpack.c.l.b16 %v1134
        %v1423 = vunpack.c.l.b16 %v1135
        %v1424 = vunpack.c.l.b16 %v1136
        %v1425 = vunpack.c.l.b16 %v1137
        %v1426 = vunpack.c.l.b16 %v1138
        %v1427 = vunpack.c.l.b16 %v1139
        %v1428 = vunpack.c.l.b16 %v1140
        %v1429 = vunpack.c.l.b16 %v1141
        %v1430 = vunpack.c.l.b16 %v1142
        %v1431 = vunpack.c.l.b16 %v1143
        %v1432 = vunpack.c.l.b16 %v1144
        %v1433 = vunpack.c.l.b16 %v1145
        %v1434 = vunpack.c.l.b16 %v1146
        %v1435 = vunpack.c.l.b16 %v1147
        %v1436 = vunpack.c.l.b16 %v1148
        %v1437 = vunpack.c.l.b16 %v1149
        %v1438 = vunpack.c.l.b16 %v1150
        %v1439 = vunpack.c.l.b16 %v1151
        %v1440 = vunpack.c.l.b16 %v1152
        %v1441 = vunpack.c.l.b16 %v1153
        %v1442 = vunpack.c.l.b16 %v1154
        %v1443 = vunpack.c.l.b16 %v1155
        %v1444 = vunpack.c.l.b16 %v1156
        %v1445 = vunpack.c.l.b16 %v1157
        %v1446 = vunpack.c.l.b16 %v1158
        %v1447 = vunpack.c.l.b16 %v1159
        %v1448 = vunpack.c.l.b16 %v1160
        %v1449 = vunpack.c.l.b16 %v1161
        %v1450 = vunpack.c.l.b16 %v1162
        %v1451 = vunpack.c.l.b16 %v1163
        %v1452 = vunpack.c.l.b16 %v1164
        %v1453 = vunpack.c.l.b16 %v1165
        %v1454 = vunpack.c.l.b16 %v1166
        %v1455 = vunpack.c.l.b16 %v1167
        %v1456 = vunpack.c.l.b16 %v1168
        %v1457 = vunpack.c.l.b16 %v1169
        %v1458 = vunpack.c.l.b16 %v1170
        %v1459 = vunpack.c.l.b16 %v1171
        %v1460 = vunpack.c.l.b16 %v1172
        %v1461 = vunpack.c.l.b16 %v1173
        %v1462 = vunpack.c.l.b16 %v1174
        %v1463 = vunpack.c.l.b16 %v1175
        %v1464 = vunpack.c.l.b16 %v1176
        %v1465 = vunpack.c.l.b16 %v1177
        %v1466 = vunpack.c.l.b16 %v1178
        %v1467 = vunpack.c.l.b16 %v1179
        %v1468 = vunpack.c.l.b16 %v1180
        %v1469 = vunpack.c.l.b16 %v1181
        %v1470 = vunpack.c.l.b16 %v1182
        %v1471 = vunpack.c.l.b16 %v1183
        %v1472 = vunpack.c.l.b16 %v1184
        %v1473 = vunpack.c.l.b16 %v1185
        %v1474 = vunpack.c.l.b16 %v1186
        %v1475 = vunpack.c.l.b16 %v1187
        %v1476 = vunpack.c.l.b16 %v1188
        %v1477 = vunpack.c.l.b16 %v1189
        %v1478 = vunpack.c.l.b16 %v1190
        %v1479 = vunpack.c.l.b16 %v1191
        %v1480 = vunpack.c.l.b16 %v1192
        %v1481 = vunpack.c.l.b16 %v1193
        %v1482 = vunpack.c.l.b16 %v1194
        %v1483 = vunpack.c.l.b16 %v1195
        %v1484 = vunpack.c.l.b16 %v1196
        %v1485 = vunpack.c.l.b16 %v1197
        %v1486 = vunpack.c.l.b16 %v1198
        %v1487 = vunpack.c.l.b16 %v1199
        %v1488 = vunpack.c.l.b16 %v1200
        %v1489 = vunpack.c.l.b16 %v1201
        %v1490 = vunpack.c.l.b16 %v1202
        %v1491 = vunpack.c.l.b16 %v1203
        %v1492 = vunpack.c.l.b16 %v1204
        %v1493 = vunpack.c.l.b16 %v1205
        %v1494 = vunpack.c.l.b16 %v1206
        %v1495 = vunpack.c.l.b16 %v1207
        %v1496 = vunpack.c.l.b16 %v1208
        %v1497 = vunpack.c.l.b16 %v1209
        %v1498 = vunpack.c.l.b16 %v1210
        %v1499 = vunpack.c.l.b16 %v1211
        %v1500 = vunpack.c.l.b16 %v1212
        %v1501 = vunpack.c.l.b16 %v1213
        %v1502 = vunpack.c.l.b16 %v1214
        %v1503 = vunpack.c.l.b16 %v1215
        %v1504 = vunpack.c.l.b16 %v1216
        %v1505 = vunpack.c.l.b16 %v1217
        %v1506 = vunpack.c.l.b16 %v1218
        %v1507 = vunpack.c.l.b16 %v1219
        %v1508 = vunpack.c.l.b16 %v1220
        %v1509 = vunpack.c.l.b16 %v1221
        %v1510 = vunpack.c.l.b16 %v1222
        %v1511 = vunpack.c.l.b16 %v1223
        %v1512 = vunpack.c.l.b16 %v1224
        %v1513 = vunpack.c.l.b16 %v1225
        %v1514 = vunpack.c.l.b16 %v1226
        %v1515 = vunpack.c.l.b16 %v1227
        %v1516 = vunpack.c.l.b16 %v1228
        %v1517 = vunpack.c.l.b16 %v1229
        %v1518 = vunpack.c.l.b16 %v1230
        %v1519 = vunpack.c.l.b16 %v1231
        %v1520 = vunpack.c.l.b16 %v1232
        %v1521 = vunpack.c.l.b16 %v1233
        %v1522 = vunpack.c.l.b16 %v1234
        %v1523 = vunpack.c.l.b16 %v1235
        %v1524 = vunpack.c.l.b16 %v1236
        %v1525 = vunpack.c.l.b16 %v1237
        %v1526 = vunpack.c.l.b16 %v1238
        %v1527 = vunpack.c.l.b16 %v1239
        %v1528 = vunpack.c.l.b16 %v1240
        %v1529 = vunpack.c.l.b16 %v1241
        %v1530 = vunpack.c.l.b16 %v1242
        %v1531 = vunpack.c.l.b16 %v1243
        %v1532 = vunpack.c.l.b16 %v1244
        %v1533 = vunpack.c.l.b16 %v1245
        %v1534 = vunpack.c.l.b16 %v1246
        %v1535 = vunpack.c.l.b16 %v1247
        %v1536 = vunpack.c.l.b16 %v1248
        %v1537 = vunpack.c.l.b16 %v1249
        %v1538 = vunpack.c.l.b16 %v1250
        %v1539 = vunpack.c.l.b16 %v1251
        %v1540 = vunpack.c.l.b16 %v1252
        %v1541 = vunpack.c.l.b16 %v1253
        %v1542 = vunpack.c.l.b16 %v1254
        %v1543 = vunpack.c.l.b16 %v1255
        %v1544 = vunpack.c.l.b16 %v1256
        %v1545 = vunpack.c.l.b16 %v1257
        %v1546 = vunpack.c.l.b16 %v1258
        %v1547 = vunpack.c.l.b16 %v1259
        %v1548 = vunpack.c.l.b16 %v1260
        %v1549 = vunpack.c.l.b16 %v1261
        %v1550 = vunpack.c.l.b16 %v1262
        %v1551 = vunpack.c.l.b16 %v1263
        %v1552 = vunpack.c.l.b16 %v1264
        %v1553 = vunpack.c.l.b16 %v1265
        %v1554 = vunpack.c.l.b16 %v1266
        %v1555 = vpack.c.b16 %v1412, %v1411
        %v1556 = vpack.c.b16 %v1414, %v1413
        %v1557 = vpack.c.b16 %v1416, %v1415
        %v1558 = vpack.c.b16 %v1418, %v1417
        %v1559 = vpack.c.b16 %v1420, %v1419
        %v1560 = vpack.c.b16 %v1422, %v1421
        %v1561 = vpack.c.b16 %v1424, %v1423
        %v1562 = vpack.c.b16 %v1426, %v1425
        %v1563 = vpack.c.b16 %v1428, %v1427
        %v1564 = vpack.c.b16 %v1430, %v1429
        %v1565 = vpack.c.b16 %v1432, %v1431
        %v1566 = vpack.c.b16 %v1434, %v1433
        %v1567 = vpack.c.b16 %v1436, %v1435
        %v1568 = vpack.c.b16 %v1438, %v1437
        %v1569 = vpack.c.b16 %v1440, %v1439
        %v1570 = vpack.c.b16 %v1442, %v1441
        %v1571 = vpack.c.b16 %v1444, %v1443
        %v1572 = vpack.c.b16 %v1446, %v1445
        %v1573 = vpack.c.b16 %v1448, %v1447
        %v1574 = vpack.c.b16 %v1450, %v1449
        %v1575 = vpack.c.b16 %v1452, %v1451
        %v1576 = vpack.c.b16 %v1454, %v1453
        %v1577 = vpack.c.b16 %v1456, %v1455
        %v1578 = vpack.c.b16 %v1458, %v1457
        %v1579 = vpack.c.b16 %v1460, %v1459
        %v1580 = vpack.c.b16 %v1462, %v1461
        %v1581 = vpack.c.b16 %v1464, %v1463
        %v1582 = vpack.c.b16 %v1466, %v1465
        %v1583 = vpack.c.b16 %v1468, %v1467
        %v1584 = vpack.c.b16 %v1470, %v1469
        %v1585 = vpack.c.b16 %v1472, %v1471
        %v1586 = vpack.c.b16 %v1474, %v1473
        %v1587 = vpack.c.b16 %v1476, %v1475
        %v1588 = vpack.c.b16 %v1478, %v1477
        %v1589 = vpack.c.b16 %v1480, %v1479
        %v1590 = vpack.c.b16 %v1482, %v1481
        %v1591 = vpack.c.b16 %v1484, %v1483
        %v1592 = vpack.c.b16 %v1486, %v1485
        %v1593 = vpack.c.b16 %v1488, %v1487
        %v1594 = vpack.c.b16 %v1490, %v1489
        %v1595 = vpack.c.b16 %v1492, %v1491
        %v1596 = vpack.c.b16 %v1494, %v1493
        %v1597 = vpack.c.b16 %v1496, %v1495
        %v1598 = vpack.c.b16 %v1498, %v1497
        %v1599 = vpack.c.b16 %v1500, %v1499
        %v1600 = vpack.c.b16 %v1502, %v1501
        %v1601 = vpack.c.b16 %v1504, %v1503
        %v1602 = vpack.c.b16 %v1506, %v1505
        %v1603 = vpack.c.b16 %v1508, %v1507
        %v1604 = vpack.c.b16 %v1510, %v1509
        %v1605 = vpack.c.b16 %v1512, %v1511
        %v1606 = vpack.c.b16 %v1514, %v1513
        %v1607 = vpack.c.b16 %v1516, %v1515
        %v1608 = vpack.c.b16 %v1518, %v1517
        %v1609 = vpack.c.b16 %v1520, %v1519
        %v1610 = vpack.c.b16 %v1522, %v1521
        %v1611 = vpack.c.b16 %v1524, %v1523
        %v1612 = vpack.c.b16 %v1526, %v1525
        %v1613 = vpack.c.b16 %v1528, %v1527
        %v1614 = vpack.c.b16 %v1530, %v1529
        %v1615 = vpack.c.b16 %v1532, %v1531
        %v1616 = vpack.c.b16 %v1534, %v1533
        %v1617 = vpack.c.b16 %v1536, %v1535
        %v1618 = vpack.c.b16 %v1538, %v1537
        %v1619 = vpack.c.b16 %v1540, %v1539
        %v1620 = vpack.c.b16 %v1542, %v1541
        %v1621 = vpack.c.b16 %v1544, %v1543
        %v1622 = vpack.c.b16 %v1546, %v1545
        %v1623 = vpack.c.b16 %v1548, %v1547
        %v1624 = vpack.c.b16 %v1550, %v1549
        %v1625 = vpack.c.b16 %v1552, %v1551
        %v1626 = vpack.c.b16 %v1554, %v1553
        %1699 = vmatprep.subr.bf16.mxu0 0
        %1700 = vmatpush1.bf16.msra.mxu0 %v1555
        %1701 = vmatprep.subr.bf16.mxu0 0
        %1702 = vmatpush1.bf16.msra.mxu0 %v1556
        %1703 = vmatprep.subr.bf16.mxu0 0
        %1704 = vmatpush1.bf16.msra.mxu0 %v1557
        %1705 = vmatprep.subr.bf16.mxu0 0
        %1706 = vmatpush1.bf16.msra.mxu0 %v1558
        %1707 = vmatprep.subr.bf16.mxu0 0
        %1708 = vmatpush1.bf16.msra.mxu0 %v1559
        %1709 = vmatprep.subr.bf16.mxu0 0
        %1710 = vmatpush1.bf16.msra.mxu0 %v1560
        %1711 = vmatprep.subr.bf16.mxu0 0
        %1712 = vmatpush1.bf16.msra.mxu0 %v1561
        %1713 = vmatprep.subr.bf16.mxu0 0
        %1714 = vmatpush1.bf16.msra.mxu0 %v1562
        %1715 = vmatprep.subr.bf16.mxu0 0
        %1716 = vmatpush1.bf16.msra.mxu0 %v1563
        %1717 = vmatprep.subr.bf16.mxu0 0
        %1718 = vmatpush1.bf16.msra.mxu0 %v1564
        %1719 = vmatprep.subr.bf16.mxu0 0
        %1720 = vmatpush1.bf16.msra.mxu0 %v1565
        %1721 = vmatprep.subr.bf16.mxu0 0
        %1722 = vmatpush1.bf16.msra.mxu0 %v1566
        %1723 = vmatprep.subr.bf16.mxu0 0
        %1724 = vmatpush1.bf16.msra.mxu0 %v1567
        %1725 = vmatprep.subr.bf16.mxu0 0
        %1726 = vmatpush1.bf16.msra.mxu0 %v1568
        %1727 = vmatprep.subr.bf16.mxu0 0
        %1728 = vmatpush1.bf16.msra.mxu0 %v1569
        %1729 = vmatprep.subr.bf16.mxu0 0
        %1730 = vmatpush1.bf16.msra.mxu0 %v1570
        %1731 = vmatprep.mubr.bf16.mxu0 %v1088
        %1732 = vmatmul.mubr.bf16.gmra.mrb[0].mxu0 %v1087
        %v1733 = vpop.f32.mrb[0].mxu0
        %v1734 = vadd.f32 0.0, %v1733
        %v1735 = vpop.f32.mrb[0].mxu0
        %v1736 = vpop.f32.mrb[0].mxu0
        %v1737 = vadd.f32 0.0, %v1736
        %v1738 = vpop.f32.mrb[0].mxu0
        %1739 = vmatprep.mubr.bf16.mxu0 %v1097
        %1740 = vmatmul.mubr.bf16.gmra.mrb[0].mxu0 %v1096
        %v1741 = vpop.f32.mrb[0].mxu0
        %v1742 = vadd.f32 0.0, %v1741
        %v1743 = vpop.f32.mrb[0].mxu0
        %v1744 = vpop.f32.mrb[0].mxu0
        %v1745 = vadd.f32 0.0, %v1744
        %v1746 = vpop.f32.mrb[0].mxu0
        %1747 = vmatprep.mubr.bf16.mxu0 %v1106
        %1748 = vmatmul.mubr.bf16.gmra.mrb[0].mxu0 %v1105
        %v1749 = vpop.f32.mrb[0].mxu0
        %v1750 = vadd.f32 0.0, %v1749
        %v1751 = vpop.f32.mrb[0].mxu0
        %v1752 = vpop.f32.mrb[0].mxu0
        %v1753 = vadd.f32 0.0, %v1752
        %v1754 = vpop.f32.mrb[0].mxu0
        %1755 = vmatprep.mubr.bf16.mxu0 %v1115
        %1756 = vmatmul.mubr.bf16.gmra.mrb[0].mxu0 %v1114
        %v1757 = vpop.f32.mrb[0].mxu0
        %v1758 = vadd.f32 0.0, %v1757
        %v1759 = vpop.f32.mrb[0].mxu0
        %v1760 = vpop.f32.mrb[0].mxu0
        %v1761 = vadd.f32 0.0, %v1760
        %v1762 = vpop.f32.mrb[0].mxu0
        %1763 = vdwg.mxu0
        %1764 = vmatprep.subr.bf16.mxu0 0
        %1765 = vmatpush1.bf16.msra.mxu0 %v1571
        %1766 = vmatprep.subr.bf16.mxu0 0
        %1767 = vmatpush1.bf16.msra.mxu0 %v1572
        %1768 = vmatprep.subr.bf16.mxu0 0
        %1769 = vmatpush1.bf16.msra.mxu0 %v1573
        %1770 = vmatprep.subr.bf16.mxu0 0
        %1771 = vmatpush1.bf16.msra.mxu0 %v1574
        %1772 = vmatprep.subr.bf16.mxu0 0
        %1773 = vmatpush1.bf16.msra.mxu0 %v1575
        %1774 = vmatprep.subr.bf16.mxu0 0
        %1775 = vmatpush1.bf16.msra.mxu0 %v1576
        %1776 = vmatprep.subr.bf16.mxu0 0
        %1777 = vmatpush1.bf16.msra.mxu0 %v1577
        %1778 = vmatprep.subr.bf16.mxu0 0
        %1779 = vmatpush1.bf16.msra.mxu0 %v1578
        %1780 = vmatprep.subr.bf16.mxu0 0
        %1781 = vmatpush1.bf16.msra.mxu0 %v1579
        %1782 = vmatprep.subr.bf16.mxu0 0
        %1783 = vmatpush1.bf16.msra.mxu0 %v1580
        %1784 = vmatprep.subr.bf16.mxu0 0
        %1785 = vmatpush1.bf16.msra.mxu0 %v1581
        %1786 = vmatprep.subr.bf16.mxu0 0
        %1787 = vmatpush1.bf16.msra.mxu0 %v1582
        %1788 = vmatprep.subr.bf16.mxu0 0
        %1789 = vmatpush1.bf16.msra.mxu0 %v1583
        %1790 = vmatprep.subr.bf16.mxu0 0
        %1791 = vmatpush1.bf16.msra.mxu0 %v1584
        %1792 = vmatprep.subr.bf16.mxu0 0
        %1793 = vmatpush1.bf16.msra.mxu0 %v1585
        %1794 = vmatprep.subr.bf16.mxu0 0
        %1795 = vmatpush1.bf16.msra.mxu0 %v1586
        %1796 = vmatprep.mubr.bf16.mxu0 %v1090
        %1797 = vmatmul.mubr.bf16.gmra.mrb[0].mxu0 %v1089
        %v1798 = vpop.f32.mrb[0].mxu0
        %v1799 = vadd.f32 %v1734, %v1798
        %v1800 = vpop.f32.mrb[0].mxu0
        %v1801 = vpop.f32.mrb[0].mxu0
        %v1802 = vadd.f32 %v1737, %v1801
        %v1803 = vpop.f32.mrb[0].mxu0
        %1804 = vmatprep.mubr.bf16.mxu0 %v1099
        %1805 = vmatmul.mubr.bf16.gmra.mrb[0].mxu0 %v1098
        %v1806 = vpop.f32.mrb[0].mxu0
        %v1807 = vadd.f32 %v1742, %v1806
        %v1808 = vpop.f32.mrb[0].mxu0
        %v1809 = vpop.f32.mrb[0].mxu0
        %v1810 = vadd.f32 %v1745, %v1809
        %v1811 = vpop.f32.mrb[0].mxu0
        %1812 = vmatprep.mubr.bf16.mxu0 %v1108
        %1813 = vmatmul.mubr.bf16.gmra.mrb[0].mxu0 %v1107
        %v1814 = vpop.f32.mrb[0].mxu0
        %v1815 = vadd.f32 %v1750, %v1814
        %v1816 = vpop.f32.mrb[0].mxu0
        %v1817 = vpop.f32.mrb[0].mxu0
        %v1818 = vadd.f32 %v1753, %v1817
        %v1819 = vpop.f32.mrb[0].mxu0
        %1820 = vmatprep.mubr.bf16.mxu0 %v1117
        %1821 = vmatmul.mubr.bf16.gmra.mrb[0].mxu0 %v1116
        %v1822 = vpop.f32.mrb[0].mxu0
        %v1823 = vadd.f32 %v1758, %v1822
        %v1824 = vpop.f32.mrb[0].mxu0
        %v1825 = vpop.f32.mrb[0].mxu0
        %v1826 = vadd.f32 %v1761, %v1825
        %v1827 = vpop.f32.mrb[0].mxu0
        %1828 = vdwg.mxu0
        %1829 = vmatprep.subr.bf16.mxu0 0
        %1830 = vmatpush1.bf16.msra.mxu0 %v1587
        %1831 = vmatprep.subr.bf16.mxu0 0
        %1832 = vmatpush1.bf16.msra.mxu0 %v1588
        %1833 = vmatprep.subr.bf16.mxu0 0
        %1834 = vmatpush1.bf16.msra.mxu0 %v1589
        %1835 = vmatprep.subr.bf16.mxu0 0
        %1836 = vmatpush1.bf16.msra.mxu0 %v1590
        %1837 = vmatprep.subr.bf16.mxu0 0
        %1838 = vmatpush1.bf16.msra.mxu0 %v1591
        %1839 = vmatprep.subr.bf16.mxu0 0
        %1840 = vmatpush1.bf16.msra.mxu0 %v1592
        %1841 = vmatprep.subr.bf16.mxu0 0
        %1842 = vmatpush1.bf16.msra.mxu0 %v1593
        %1843 = vmatprep.subr.bf16.mxu0 0
        %1844 = vmatpush1.bf16.msra.mxu0 %v1594
        %1845 = vmatprep.subr.bf16.mxu0 0
        %1846 = vmatpush1.bf16.msra.mxu0 %v1595
        %1847 = vmatprep.subr.bf16.mxu0 0
        %1848 = vmatpush1.bf16.msra.mxu0 %v1596
        %1849 = vmatprep.subr.bf16.mxu0 0
        %1850 = vmatpush1.bf16.msra.mxu0 %v1597
        %1851 = vmatprep.subr.bf16.mxu0 0
        %1852 = vmatpush1.bf16.msra.mxu0 %v1598
        %1853 = vmatprep.subr.bf16.mxu0 0
        %1854 = vmatpush1.bf16.msra.mxu0 %v1599
        %1855 = vmatprep.subr.bf16.mxu0 0
        %1856 = vmatpush1.bf16.msra.mxu0 %v1600
        %1857 = vmatprep.subr.bf16.mxu0 0
        %1858 = vmatpush1.bf16.msra.mxu0 %v1601
        %1859 = vmatprep.subr.bf16.mxu0 0
        %1860 = vmatpush1.bf16.msra.mxu0 %v1602
        %1861 = vmatprep.mubr.bf16.mxu0 %v1092
        %1862 = vmatmul.mubr.bf16.gmra.mrb[0].mxu0 %v1091
        %v1863 = vpop.f32.mrb[0].mxu0
        %v1864 = vadd.f32 %v1799, %v1863
        %v1865 = vpop.f32.mrb[0].mxu0
        %v1866 = vpop.f32.mrb[0].mxu0
        %v1867 = vadd.f32 %v1802, %v1866
        %v1868 = vpop.f32.mrb[0].mxu0
        %1869 = vmatprep.mubr.bf16.mxu0 %v1101
        %1870 = vmatmul.mubr.bf16.gmra.mrb[0].mxu0 %v1100
        %v1871 = vpop.f32.mrb[0].mxu0
        %v1872 = vadd.f32 %v1807, %v1871
        %v1873 = vpop.f32.mrb[0].mxu0
        %v1874 = vpop.f32.mrb[0].mxu0
        %v1875 = vadd.f32 %v1810, %v1874
        %v1876 = vpop.f32.mrb[0].mxu0
        %1877 = vmatprep.mubr.bf16.mxu0 %v1110
        %1878 = vmatmul.mubr.bf16.gmra.mrb[0].mxu0 %v1109
        %v1879 = vpop.f32.mrb[0].mxu0
        %v1880 = vadd.f32 %v1815, %v1879
        %v1881 = vpop.f32.mrb[0].mxu0
        %v1882 = vpop.f32.mrb[0].mxu0
        %v1883 = vadd.f32 %v1818, %v1882
        %v1884 = vpop.f32.mrb[0].mxu0
        %1885 = vmatprep.mubr.bf16.mxu0 %v1119
        %1886 = vmatmul.mubr.bf16.gmra.mrb[0].mxu0 %v1118
        %v1887 = vpop.f32.mrb[0].mxu0
        %v1888 = vadd.f32 %v1823, %v1887
        %v1889 = vpop.f32.mrb[0].mxu0
        %v1890 = vpop.f32.mrb[0].mxu0
        %v1891 = vadd.f32 %v1826, %v1890
        %v1892 = vpop.f32.mrb[0].mxu0
        %1893 = vdwg.mxu0
        %1894 = vmatprep.subr.bf16.mxu0 0
        %1895 = vmatpush1.bf16.msra.mxu0 %v1603
        %1896 = vmatprep.subr.bf16.mxu0 0
        %1897 = vmatpush1.bf16.msra.mxu0 %v1604
        %1898 = vmatprep.subr.bf16.mxu0 0
        %1899 = vmatpush1.bf16.msra.mxu0 %v1605
        %1900 = vmatprep.subr.bf16.mxu0 0
        %1901 = vmatpush1.bf16.msra.mxu0 %v1606
        %1902 = vmatprep.subr.bf16.mxu0 0
        %1903 = vmatpush1.bf16.msra.mxu0 %v1607
        %1904 = vmatprep.subr.bf16.mxu0 0
        %1905 = vmatpush1.bf16.msra.mxu0 %v1608
        %1906 = vmatprep.subr.bf16.mxu0 0
        %1907 = vmatpush1.bf16.msra.mxu0 %v1609
        %1908 = vmatprep.subr.bf16.mxu0 0
        %1909 = vmatpush1.bf16.msra.mxu0 %v1610
        %1910 = vmatprep.subr.bf16.mxu0 0
        %1911 = vmatpush1.bf16.msra.mxu0 %v1611
        %1912 = vmatprep.subr.bf16.mxu0 0
        %1913 = vmatpush1.bf16.msra.mxu0 %v1612
        %1914 = vmatprep.subr.bf16.mxu0 0
        %1915 = vmatpush1.bf16.msra.mxu0 %v1613
        %1916 = vmatprep.subr.bf16.mxu0 0
        %1917 = vmatpush1.bf16.msra.mxu0 %v1614
        %1918 = vmatprep.subr.bf16.mxu0 0
        %1919 = vmatpush1.bf16.msra.mxu0 %v1615
        %1920 = vmatprep.subr.bf16.mxu0 0
        %1921 = vmatpush1.bf16.msra.mxu0 %v1616
        %1922 = vmatprep.subr.bf16.mxu0 0
        %1923 = vmatpush1.bf16.msra.mxu0 %v1617
        %1924 = vmatprep.subr.bf16.mxu0 0
        %1925 = vmatpush1.bf16.msra.mxu0 %v1618
        %1926 = vmatprep.mubr.bf16.mxu0 %v1094
        %1927 = vmatmul.mubr.bf16.gmra.mrb[0].mxu0 %v1093
        %v1928 = vpop.f32.mrb[0].mxu0
        %v1929 = vadd.f32 %v1864, %v1928
        %v1930 = vpop.f32.mrb[0].mxu0
        %v1931 = vpop.f32.mrb[0].mxu0
        %v1932 = vadd.f32 %v1867, %v1931
        %v1933 = vpop.f32.mrb[0].mxu0
        %1934 = vmatprep.mubr.bf16.mxu0 %v1103
        %1935 = vmatmul.mubr.bf16.gmra.mrb[0].mxu0 %v1102
        %v1936 = vpop.f32.mrb[0].mxu0
        %v1937 = vadd.f32 %v1872, %v1936
        %v1938 = vpop.f32.mrb[0].mxu0
        %v1939 = vpop.f32.mrb[0].mxu0
        %v1940 = vadd.f32 %v1875, %v1939
        %v1941 = vpop.f32.mrb[0].mxu0
        %1942 = vmatprep.mubr.bf16.mxu0 %v1112
        %1943 = vmatmul.mubr.bf16.gmra.mrb[0].mxu0 %v1111
        %v1944 = vpop.f32.mrb[0].mxu0
        %v1945 = vadd.f32 %v1880, %v1944
        %v1946 = vpop.f32.mrb[0].mxu0
        %v1947 = vpop.f32.mrb[0].mxu0
        %v1948 = vadd.f32 %v1883, %v1947
        %v1949 = vpop.f32.mrb[0].mxu0
        %1950 = vmatprep.mubr.bf16.mxu0 %v1121
        %1951 = vmatmul.mubr.bf16.gmra.mrb[0].mxu0 %v1120
        %v1952 = vpop.f32.mrb[0].mxu0
        %v1953 = vadd.f32 %v1888, %v1952
        %v1954 = vpop.f32.mrb[0].mxu0
        %v1955 = vpop.f32.mrb[0].mxu0
        %v1956 = vadd.f32 %v1891, %v1955
        %v1957 = vpop.f32.mrb[0].mxu0
        %1958 = vdwg.mxu0
        %1959 = vmatprep.subr.bf16.mxu0 0
        %1960 = vmatpush1.bf16.msra.mxu0 %v1619
        %1961 = vmatprep.subr.bf16.mxu0 0
        %1962 = vmatpush1.bf16.msra.mxu0 %v1620
        %1963 = vmatprep.subr.bf16.mxu0 0
        %1964 = vmatpush1.bf16.msra.mxu0 %v1621
        %1965 = vmatprep.subr.bf16.mxu0 0
        %1966 = vmatpush1.bf16.msra.mxu0 %v1622
        %1967 = vmatprep.subr.bf16.mxu0 0
        %1968 = vmatpush1.bf16.msra.mxu0 %v1623
        %1969 = vmatprep.subr.bf16.mxu0 0
        %1970 = vmatpush1.bf16.msra.mxu0 %v1624
        %1971 = vmatprep.subr.bf16.mxu0 0
        %1972 = vmatpush1.bf16.msra.mxu0 %v1625
        %1973 = vmatprep.subr.bf16.mxu0 0
        %1974 = vmatpush1.bf16.msra.mxu0 %v1626
        %1975 = vmatprep.subr.bf16.mxu0 0
        %1976 = vmatpush1.bf16.msra.mxu0 0
        %1977 = vmatprep.subr.bf16.mxu0 0
        %1978 = vmatpush1.bf16.msra.mxu0 0
        %1979 = vmatprep.subr.bf16.mxu0 0
        %1980 = vmatpush1.bf16.msra.mxu0 0
        %1981 = vmatprep.subr.bf16.mxu0 0
        %1982 = vmatpush1.bf16.msra.mxu0 0
        %1983 = vmatprep.subr.bf16.mxu0 0
        %1984 = vmatpush1.bf16.msra.mxu0 0
        %1985 = vmatprep.subr.bf16.mxu0 0
        %1986 = vmatpush1.bf16.msra.mxu0 0
        %1987 = vmatprep.subr.bf16.mxu0 0
        %1988 = vmatpush1.bf16.msra.mxu0 0
        %1989 = vmatprep.subr.bf16.mxu0 0
        %1990 = vmatpush1.bf16.msra.mxu0 0
        %1991 = vmatprep.mubr.bf16.mxu0 0
        %1992 = vmatmul.mubr.bf16.gmra.mrb[0].mxu0 %v1095
        %v1993 = vpop.f32.mrb[0].mxu0
        %v1994 = vadd.f32 %v1929, %v1993
        %v1995 = vpop.f32.mrb[0].mxu0
        %v1996 = vpop.f32.mrb[0].mxu0
        %v1997 = vadd.f32 %v1932, %v1996
        %v1998 = vpop.f32.mrb[0].mxu0
        %1999 = vmatprep.mubr.bf16.mxu0 0
        %2000 = vmatmul.mubr.bf16.gmra.mrb[0].mxu0 %v1104
        %v2001 = vpop.f32.mrb[0].mxu0
        %v2002 = vadd.f32 %v1937, %v2001
        %v2003 = vpop.f32.mrb[0].mxu0
        %v2004 = vpop.f32.mrb[0].mxu0
        %v2005 = vadd.f32 %v1940, %v2004
        %v2006 = vpop.f32.mrb[0].mxu0
        %2007 = vmatprep.mubr.bf16.mxu0 0
        %2008 = vmatmul.mubr.bf16.gmra.mrb[0].mxu0 %v1113
        %v2009 = vpop.f32.mrb[0].mxu0
        %v2010 = vadd.f32 %v1945, %v2009
        %v2011 = vpop.f32.mrb[0].mxu0
        %v2012 = vpop.f32.mrb[0].mxu0
        %v2013 = vadd.f32 %v1948, %v2012
        %v2014 = vpop.f32.mrb[0].mxu0
        %2015 = vmatprep.mubr.bf16.mxu0 0
        %2016 = vmatmul.mubr.bf16.gmra.mrb[0].mxu0 %v1122
        %v2017 = vpop.f32.mrb[0].mxu0
        %v2018 = vadd.f32 %v1953, %v2017
        %v2019 = vpop.f32.mrb[0].mxu0
        %v2020 = vpop.f32.mrb[0].mxu0
        %v2021 = vadd.f32 %v1956, %v2020
        %v2022 = vpop.f32.mrb[0].mxu0
        %2023 = vdwg.mxu0
        %2024 = vst [vmem:[%s377] sm:$0xff] %v1994
        %2025 = vst [vmem:[%s377 + $0x8] sm:$0xff] %v1997
        %2026 = vst [vmem:[%s377 + $0x10] sm:$0xff] %v2002
        %2027 = vst [vmem:[%s377 + $0x18] sm:$0xff] %v2005
        %2028 = vst [vmem:[%s377 + $0x20] sm:$0xff] %v2010
        %2029 = vst [vmem:[%s377 + $0x28] sm:$0xff] %v2013
        %2030 = vst [vmem:[%s377 + $0x30] sm:$0xff] %v2018
        %2031 = vst [vmem:[%s377 + $0x38] sm:$0xff] %v2021
        %v2032 = vadd.f32 %v1994, %v1997
        %v2033 = vadd.f32 %v2032, %v2002
        %v2034 = vadd.f32 %v2033, %v2005
        %v2035 = vadd.f32 %v2034, %v2010
        %v2036 = vadd.f32 %v2035, %v2013
        %v2037 = vadd.f32 %v2036, %v2018
        %v2038 = vadd.f32 %v2037, %v2021
        %v2039 = vrot.slane %v2038, 4
        %v2040 = vadd.f32 %v2038, %v2039
        %v2041 = vrot.slane %v2040, 2
        %v2042 = vadd.f32 %v2040, %v2041
        %v2043 = vrot.slane %v2042, 1
        %v2044 = vadd.f32 %v2042, %v2043
        %2045 = vst [vmem:[%s384] sm:$0x1] %v2044
        %v2046 = vmul.f32 %v1994, %v1994
        %v2047 = vmul.f32 %v1997, %v1997
        %v2048 = vmul.f32 %v2002, %v2002
        %v2049 = vmul.f32 %v2005, %v2005
        %v2050 = vmul.f32 %v2010, %v2010
        %v2051 = vmul.f32 %v2013, %v2013
        %v2052 = vmul.f32 %v2018, %v2018
        %v2053 = vmul.f32 %v2021, %v2021
        %v2054 = vadd.f32 %v2046, %v2047
        %v2055 = vadd.f32 %v2054, %v2048
        %v2056 = vadd.f32 %v2055, %v2049
        %v2057 = vadd.f32 %v2056, %v2050
        %v2058 = vadd.f32 %v2057, %v2051
        %v2059 = vadd.f32 %v2058, %v2052
        %v2060 = vadd.f32 %v2059, %v2053
        %v2061 = vrot.slane %v2060, 4
        %v2062 = vadd.f32 %v2060, %v2061
        %v2063 = vrot.slane %v2062, 2
        %v2064 = vadd.f32 %v2062, %v2063
        %v2065 = vrot.slane %v2064, 1
        %v2066 = vadd.f32 %v2064, %v2065
        %2067 = vst [vmem:[%s384 + $0x1] sm:$0x1] %v2066
        %v2068 = vld [vmem:[%s418] sm:$0xf]
        %v2069 = vld [vmem:[%s418 + $0x8] sm:$0xf]
        %v2070 = vld [vmem:[%s418 + $0x10] sm:$0xf]
        %v2071 = vld [vmem:[%s418 + $0x18] sm:$0xf]
        %v2072 = vld [vmem:[%s418 + $0x20] sm:$0xf]
        %v2073 = vld [vmem:[%s418 + $0x28] sm:$0xf]
        %v2074 = vld [vmem:[%s418 + $0x30] sm:$0xf]
        %v2075 = vld [vmem:[%s418 + $0x38] sm:$0xf]
        %v2076 = vld [vmem:[%s5] sm:$0xf]
        %v2077 = vld [vmem:[%s5 + $0x4] sm:$0xf]
        %v2078 = vld [vmem:[%s5 + $0x8] sm:$0xf]
        %v2079 = vld [vmem:[%s5 + $0xc] sm:$0xf]
        %v2080 = vld [vmem:[%s5 + $0x10] sm:$0xf]
        %v2081 = vld [vmem:[%s5 + $0x14] sm:$0xf]
        %v2082 = vld [vmem:[%s5 + $0x18] sm:$0xf]
        %v2083 = vld [vmem:[%s5 + $0x1c] sm:$0xf]
        %v2084 = vld [vmem:[%s5 + $0x20] sm:$0xf]
        %v2085 = vld [vmem:[%s5 + $0x24] sm:$0xf]
        %v2086 = vld [vmem:[%s5 + $0x28] sm:$0xf]
        %v2087 = vld [vmem:[%s5 + $0x2c] sm:$0xf]
        %v2088 = vld [vmem:[%s5 + $0x30] sm:$0xf]
        %v2089 = vld [vmem:[%s5 + $0x34] sm:$0xf]
        %v2090 = vld [vmem:[%s5 + $0x38] sm:$0xf]
        %v2091 = vld [vmem:[%s5 + $0x3c] sm:$0xf]
        %v2100 = vunpack.c.l.b16 %v2068
        %v2101 = vunpack.c.l.b16 %v2069
        %v2102 = vunpack.c.l.b16 %v2070
        %v2103 = vunpack.c.l.b16 %v2071
        %v2104 = vunpack.c.l.b16 %v2072
        %v2105 = vunpack.c.l.b16 %v2073
        %v2106 = vunpack.c.l.b16 %v2074
        %v2107 = vunpack.c.l.b16 %v2075
        %v2108 = vpack.c.b16 %v2101, %v2100
        %v2109 = vpack.c.b16 %v2103, %v2102
        %v2110 = vpack.c.b16 %v2105, %v2104
        %v2111 = vpack.c.b16 %v2107, %v2106
        %v2132 = vunpack.c.l.b16 %v2076
        %v2133 = vunpack.c.l.b16 %v2077
        %v2134 = vunpack.c.l.b16 %v2078
        %v2135 = vunpack.c.l.b16 %v2079
        %v2136 = vunpack.c.l.b16 %v2080
        %v2137 = vunpack.c.l.b16 %v2081
        %v2138 = vunpack.c.l.b16 %v2082
        %v2139 = vunpack.c.l.b16 %v2083
        %v2140 = vunpack.c.l.b16 %v2084
        %v2141 = vunpack.c.l.b16 %v2085
        %v2142 = vunpack.c.l.b16 %v2086
        %v2143 = vunpack.c.l.b16 %v2087
        %v2144 = vunpack.c.l.b16 %v2088
        %v2145 = vunpack.c.l.b16 %v2089
        %v2146 = vunpack.c.l.b16 %v2090
        %v2147 = vunpack.c.l.b16 %v2091
        %v2148 = vpack.c.b16 %v2133, %v2132
        %v2149 = vpack.c.b16 %v2135, %v2134
        %v2150 = vpack.c.b16 %v2137, %v2136
        %v2151 = vpack.c.b16 %v2139, %v2138
        %v2152 = vpack.c.b16 %v2141, %v2140
        %v2153 = vpack.c.b16 %v2143, %v2142
        %v2154 = vpack.c.b16 %v2145, %v2144
        %v2155 = vpack.c.b16 %v2147, %v2146
        %2164 = vmatprep.subr.bf16.mxu0 0
        %2165 = vmatpush1.bf16.msra.mxu0 %v2148
        %2166 = vmatprep.subr.bf16.mxu0 0
        %2167 = vmatpush1.bf16.msra.mxu0 %v2149
        %2168 = vmatprep.subr.bf16.mxu0 0
        %2169 = vmatpush1.bf16.msra.mxu0 %v2150
        %2170 = vmatprep.subr.bf16.mxu0 0
        %2171 = vmatpush1.bf16.msra.mxu0 %v2151
        %2172 = vmatprep.subr.bf16.mxu0 0
        %2173 = vmatpush1.bf16.msra.mxu0 %v2152
        %2174 = vmatprep.subr.bf16.mxu0 0
        %2175 = vmatpush1.bf16.msra.mxu0 %v2153
        %2176 = vmatprep.subr.bf16.mxu0 0
        %2177 = vmatpush1.bf16.msra.mxu0 %v2154
        %2178 = vmatprep.subr.bf16.mxu0 0
        %2179 = vmatpush1.bf16.msra.mxu0 %v2155
        %2180 = vmatprep.subr.bf16.mxu0 0
        %2181 = vmatpush1.bf16.msra.mxu0 0
        %2182 = vmatprep.subr.bf16.mxu0 0
        %2183 = vmatpush1.bf16.msra.mxu0 0
        %2184 = vmatprep.subr.bf16.mxu0 0
        %2185 = vmatpush1.bf16.msra.mxu0 0
        %2186 = vmatprep.subr.bf16.mxu0 0
        %2187 = vmatpush1.bf16.msra.mxu0 0
        %2188 = vmatprep.subr.bf16.mxu0 0
        %2189 = vmatpush1.bf16.msra.mxu0 0
        %2190 = vmatprep.subr.bf16.mxu0 0
        %2191 = vmatpush1.bf16.msra.mxu0 0
        %2192 = vmatprep.subr.bf16.mxu0 0
        %2193 = vmatpush1.bf16.msra.mxu0 0
        %2194 = vmatprep.subr.bf16.mxu0 0
        %2195 = vmatpush1.bf16.msra.mxu0 0
        %2196 = vmatprep.mubr.bf16.mxu0 0
        %2197 = vmatmul.mubr.bf16.gmra.mrb[0].mxu0 %v2108
        %v2198 = vpop.f32.mrb[0].mxu0
        %v2199 = vadd.f32 0.0, %v2198
        %v2200 = vpop.f32.mrb[0].mxu0
        %v2201 = vpop.f32.mrb[0].mxu0
        %v2202 = vadd.f32 0.0, %v2201
        %v2203 = vpop.f32.mrb[0].mxu0
        %2204 = vmatprep.mubr.bf16.mxu0 0
        %2205 = vmatmul.mubr.bf16.gmra.mrb[0].mxu0 %v2109
        %v2206 = vpop.f32.mrb[0].mxu0
        %v2207 = vadd.f32 0.0, %v2206
        %v2208 = vpop.f32.mrb[0].mxu0
        %v2209 = vpop.f32.mrb[0].mxu0
        %v2210 = vadd.f32 0.0, %v2209
        %v2211 = vpop.f32.mrb[0].mxu0
        %2212 = vmatprep.mubr.bf16.mxu0 0
        %2213 = vmatmul.mubr.bf16.gmra.mrb[0].mxu0 %v2110
        %v2214 = vpop.f32.mrb[0].mxu0
        %v2215 = vadd.f32 0.0, %v2214
        %v2216 = vpop.f32.mrb[0].mxu0
        %v2217 = vpop.f32.mrb[0].mxu0
        %v2218 = vadd.f32 0.0, %v2217
        %v2219 = vpop.f32.mrb[0].mxu0
        %2220 = vmatprep.mubr.bf16.mxu0 0
        %2221 = vmatmul.mubr.bf16.gmra.mrb[0].mxu0 %v2111
        %v2222 = vpop.f32.mrb[0].mxu0
        %v2223 = vadd.f32 0.0, %v2222
        %v2224 = vpop.f32.mrb[0].mxu0
        %v2225 = vpop.f32.mrb[0].mxu0
        %v2226 = vadd.f32 0.0, %v2225
        %v2227 = vpop.f32.mrb[0].mxu0
        %2228 = vdwg.mxu0
        %2229 = vst [vmem:[%s391] sm:$0xff] %v2199
        %2230 = vst [vmem:[%s391 + $0x8] sm:$0xff] %v2202
        %2231 = vst [vmem:[%s391 + $0x10] sm:$0xff] %v2207
        %2232 = vst [vmem:[%s391 + $0x18] sm:$0xff] %v2210
        %2233 = vst [vmem:[%s391 + $0x20] sm:$0xff] %v2215
        %2234 = vst [vmem:[%s391 + $0x28] sm:$0xff] %v2218
        %2235 = vst [vmem:[%s391 + $0x30] sm:$0xff] %v2223
        %2236 = vst [vmem:[%s391 + $0x38] sm:$0xff] %v2226
        %v2237 = vadd.f32 %v2199, %v2202
        %v2238 = vadd.f32 %v2237, %v2207
        %v2239 = vadd.f32 %v2238, %v2210
        %v2240 = vadd.f32 %v2239, %v2215
        %v2241 = vadd.f32 %v2240, %v2218
        %v2242 = vadd.f32 %v2241, %v2223
        %v2243 = vadd.f32 %v2242, %v2226
        %v2244 = vrot.slane %v2243, 4
        %v2245 = vadd.f32 %v2243, %v2244
        %v2246 = vrot.slane %v2245, 2
        %v2247 = vadd.f32 %v2245, %v2246
        %v2248 = vrot.slane %v2247, 1
        %v2249 = vadd.f32 %v2247, %v2248
        %2250 = vst [vmem:[%s398] sm:$0x1] %v2249
        %v2251 = vmul.f32 %v2199, %v2199
        %v2252 = vmul.f32 %v2202, %v2202
        %v2253 = vmul.f32 %v2207, %v2207
        %v2254 = vmul.f32 %v2210, %v2210
        %v2255 = vmul.f32 %v2215, %v2215
        %v2256 = vmul.f32 %v2218, %v2218
        %v2257 = vmul.f32 %v2223, %v2223
        %v2258 = vmul.f32 %v2226, %v2226
        %v2259 = vadd.f32 %v2251, %v2252
        %v2260 = vadd.f32 %v2259, %v2253
        %v2261 = vadd.f32 %v2260, %v2254
        %v2262 = vadd.f32 %v2261, %v2255
        %v2263 = vadd.f32 %v2262, %v2256
        %v2264 = vadd.f32 %v2263, %v2257
        %v2265 = vadd.f32 %v2264, %v2258
        %v2266 = vrot.slane %v2265, 4
        %v2267 = vadd.f32 %v2265, %v2266
        %v2268 = vrot.slane %v2267, 2
        %v2269 = vadd.f32 %v2267, %v2268
        %v2270 = vrot.slane %v2269, 1
        %v2271 = vadd.f32 %v2269, %v2270
        %2272 = vst [vmem:[%s398 + $0x1] sm:$0x1] %v2271
        %s2273 = sand.u32 %s184, 1
        %s2274 = scalar_lea.sflag [#allocation4], %s2273
        %s2275 = sand.u32 %s184, 1
        %s2276 = smul.addr %s2275, 64
        %s2277 = scalar_lea.vmem [#allocation3], %s2276
        %s2278 = sand.u32 %s30, 1
        %s2279 = scalar_lea.sflag [#allocation6], %s2278
        %s2280 = sand.u32 %s210, 1
        %s2281 = smul.addr %s2280, 2
        %s2282 = scalar_lea.vmem [#allocation5], %s2281
        %s2283 = sand.u32 %s30, 1
        %s2284 = scalar_lea.sflag [#allocation6], %s2283
        %s2285 = sand.u32 %s236, 1
        %s2286 = smul.addr %s2285, 64
        %s2287 = scalar_lea.vmem [#allocation7], %s2286
        %s2288 = sand.u32 %s262, 1
        %s2289 = scalar_lea.sflag [#allocation9], %s2288
        %s2290 = sand.u32 %s262, 1
        %s2291 = smul.addr %s2290, 2
        %s2292 = scalar_lea.vmem [#allocation8], %s2291
        // Predicated region
        $region45: #{tpu_custom_call.1} parent=43 // pred_check
          %p2293 = pneg %p194
        $region46: #{tpu_custom_call.1} parent=43 // pred_check_branch
          %2295 = sbr.rel (%p2293) target = $region48
        $region47: #{tpu_custom_call.1} parent=43 // pred_region
          %s2296 = smul.u32 8, %s30
          %s2298 = ssub.s32 1024, 1024
          %2299 = vsyncadd %s2274, %s2298
          %s2300 = smul.addr %s2296, 128
          %s2301 = scalar_lea.hbm %s6, %s2300
          %s2302 = sshll.u32 %s2277, 4
          %s2303 = int_to_ptr.vmem [resolvable:$true] %s2302
          %2308 = dma.vmem_to_hbm [thread:$0]  %s2303, 1024, %s2301, %s2274, 128, 128, 8
        $region48: #{tpu_custom_call.1} parent=43 // pred_fallthru
          _
        // Predicated region
        $region49: #{tpu_custom_call.1} parent=43 // pred_check
          %p2309 = pneg %p220
        $region50: #{tpu_custom_call.1} parent=43 // pred_check_branch
          %2311 = sbr.rel (%p2309) target = $region52
        $region51: #{tpu_custom_call.1} parent=43 // pred_region
          %s2313 = ssub.s32 32, 32
          %2314 = vsyncadd %s2279, %s2313
          %s2315 = smul.addr %s30, 32
          %s2316 = scalar_lea.hbm %s7, %s2315
          %s2318 = sshll.u32 %s2282, 4
          %s2319 = int_to_ptr.vmem [resolvable:$true] %s2318
          %2321 = dma.vmem_to_hbm [thread:$0]  %s2319, 32, %s2316, %s2279
        $region52: #{tpu_custom_call.1} parent=43 // pred_fallthru
          _
        // Predicated region
        $region53: #{tpu_custom_call.1} parent=43 // pred_check
          %p2322 = pneg %p246
        $region54: #{tpu_custom_call.1} parent=43 // pred_check_branch
          %2324 = sbr.rel (%p2322) target = $region56
        $region55: #{tpu_custom_call.1} parent=43 // pred_region
          %s2325 = smul.u32 8, %s30
          %s2327 = ssub.s32 1024, 1024
          %2328 = vsyncadd %s2284, %s2327
          %s2329 = smul.addr %s2325, 128
          %s2330 = scalar_lea.hbm %s8, %s2329
          %s2331 = sshll.u32 %s2287, 4
          %s2332 = int_to_ptr.vmem [resolvable:$true] %s2331
          %2337 = dma.vmem_to_hbm [thread:$0]  %s2332, 1024, %s2330, %s2284, 128, 128, 8
        $region56: #{tpu_custom_call.1} parent=43 // pred_fallthru
          _
        // Predicated region
        $region57: #{tpu_custom_call.1} parent=43 // pred_check
          %p2338 = pneg %p272
        $region58: #{tpu_custom_call.1} parent=43 // pred_check_branch
          %2340 = sbr.rel (%p2338) target = $region60
        $region59: #{tpu_custom_call.1} parent=43 // pred_region
          %s2342 = ssub.s32 32, 32
          %2343 = vsyncadd %s2289, %s2342
          %s2344 = smul.addr %s30, 32
          %s2345 = scalar_lea.hbm %s9, %s2344
          %s2347 = sshll.u32 %s2292, 4
          %s2348 = int_to_ptr.vmem [resolvable:$true] %s2347
          %2350 = dma.vmem_to_hbm [thread:$0]  %s2348, 32, %s2345, %s2289
        $region60: #{tpu_custom_call.1} parent=43 // pred_fallthru
          _
      $region44: #{tpu_custom_call.1} parent=5 // pred_fallthru
        _
      %p2351 = scmp.le.s32.totalorder 2, %s25
      // Predicated region
      $region61: #{tpu_custom_call.1} parent=5 // pred_check
        %p2352 = pneg %p2351
      $region62: #{tpu_custom_call.1} parent=5 // pred_check_branch
        %2354 = sbr.rel (%p2352) target = $region64
      $region63: #{tpu_custom_call.1} parent=5 // pred_region
        %s2355 = ssub.s32 %s25, 2
        // Predicated region
        $region65: #{tpu_custom_call.1} parent=63 // pred_check
          %p2356 = pneg %p200
        $region66: #{tpu_custom_call.1} parent=63 // pred_check_branch
          %2358 = sbr.rel (%p2356) target = $region68
        $region67: #{tpu_custom_call.1} parent=63 // pred_region
          %s2359 = sand.u32 %s185, 1
          %s2360 = scalar_lea.sflag [#allocation4], %s2359
          %s2361 = sand.u32 %s185, 1
          %s2362 = smul.addr %s2361, 64
          %s2363 = scalar_lea.vmem [#allocation3], %s2362
          %2364 = dma.done %s2360, 1024
        $region68: #{tpu_custom_call.1} parent=63 // pred_fallthru
          _
        // Predicated region
        $region69: #{tpu_custom_call.1} parent=63 // pred_check
          %p2365 = pneg %p226
        $region70: #{tpu_custom_call.1} parent=63 // pred_check_branch
          %2367 = sbr.rel (%p2365) target = $region72
        $region71: #{tpu_custom_call.1} parent=63 // pred_region
          %s2368 = sand.u32 %s31, 1
          %s2369 = scalar_lea.sflag [#allocation6], %s2368
          %s2370 = sand.u32 %s211, 1
          %s2371 = smul.addr %s2370, 2
          %s2372 = scalar_lea.vmem [#allocation5], %s2371
          %2373 = dma.done %s2369, 32
        $region72: #{tpu_custom_call.1} parent=63 // pred_fallthru
          _
        // Predicated region
        $region73: #{tpu_custom_call.1} parent=63 // pred_check
          %p2374 = pneg %p252
        $region74: #{tpu_custom_call.1} parent=63 // pred_check_branch
          %2376 = sbr.rel (%p2374) target = $region76
        $region75: #{tpu_custom_call.1} parent=63 // pred_region
          %s2377 = sand.u32 %s31, 1
          %s2378 = scalar_lea.sflag [#allocation6], %s2377
          %s2379 = sand.u32 %s237, 1
          %s2380 = smul.addr %s2379, 64
          %s2381 = scalar_lea.vmem [#allocation7], %s2380
          %2382 = dma.done %s2378, 1024
        $region76: #{tpu_custom_call.1} parent=63 // pred_fallthru
          _
        // Predicated region
        $region77: #{tpu_custom_call.1} parent=63 // pred_check
          %p2383 = pneg %p278
        $region78: #{tpu_custom_call.1} parent=63 // pred_check_branch
          %2385 = sbr.rel (%p2383) target = $region80
        $region79: #{tpu_custom_call.1} parent=63 // pred_region
          %s2386 = sand.u32 %s263, 1
          %s2387 = scalar_lea.sflag [#allocation9], %s2386
          %s2388 = sand.u32 %s263, 1
          %s2389 = smul.addr %s2388, 2
          %s2390 = scalar_lea.vmem [#allocation8], %s2389
          %2391 = dma.done %s2387, 32
        $region80: #{tpu_custom_call.1} parent=63 // pred_fallthru
          _
      $region64: #{tpu_custom_call.1} parent=5 // pred_fallthru
        _
    $region6: #{tpu_custom_call.1} parent=1 // loop_footer
      %s29 = sadd.s32 1, %s25
    $region7: #{tpu_custom_call.1} parent=1 // loop_footer_branch
      %24 = sbr.rel target = $region3
    $region8: #{tpu_custom_call.1} parent=1 // loop_exit
      _
    %2392 = vsyncpa [#allocation4], 1
    %s2393 = scalar_lea.sflag [#allocation4], 1
    %2394 = vsyncpa %s2393, 1
    %2395 = vsyncpa [#allocation6], 1
    %s2396 = scalar_lea.sflag [#allocation6], 1
    %2397 = vsyncpa %s2396, 1
    %2398 = vsyncpa [#allocation9], 1
    %s2399 = scalar_lea.sflag [#allocation9], 1
    %2400 = vsyncpa %s2399, 1

</llo_original>
